<compile_context>
chip_gen: v5e
topology: v5e:2x2
jax: 0.10.0
libtpu: 0.0.40
codegen_flags: <defaults>
</compile_context>

<pallas_src>
import functools
import numpy as np
import jax
import jax.numpy as jnp
from jax import lax
from jax.experimental import pallas as pl
from jax.experimental.pallas import tpu as pltpu

VMEM = pltpu.MemorySpace.VMEM
SMEM = pltpu.MemorySpace.SMEM
F32 = jnp.float32
BF16 = jnp.bfloat16


def _ln(x, g, b, eps=1e-5):
    """LayerNorm over the last axis in f32. g/b broadcastable to x."""
    mu = jnp.mean(x, axis=-1, keepdims=True)
    var = jnp.mean(jnp.square(x - mu), axis=-1, keepdims=True)
    return (x - mu) * lax.rsqrt(var + eps) * g + b


def _pick_tile(n, max_tile):
    """Largest divisor of n that is <= max_tile (keeps blocks exact)."""
    t = min(n, max_tile)
    while n % t:
        t -= 1
    return t


# ---------------------------------------------------------------------------
# Fused residual transformer, grid = (batch_tile, layer).
# Activations are kept 2-D (B_tile*S, D) so every linear layer is a plain 2-D
# bf16 MXU matmul; attention is batched over (image, head) with one batch dim.
# ---------------------------------------------------------------------------
def _fused_block_kernel(*refs, heads, seq, causal, prologue):
    if prologue:
        (x_ref, embw_ref, add_ref, pre_g, pre_b, *rest) = refs
    else:
        (x_ref, *rest) = refs
    (ln1_g, ln1_b, wqkv, bqkv, wo, bo,
     ln2_g, ln2_b, w1, b1, w2, b2, o_ref, x_sc) = rest

    l = pl.program_id(1)
    R, D = x_sc.shape                    # R = B_tile * S rows
    S = seq
    BT = R // S
    H = heads
    Dh = D // H
    scale = 1.0 / float(Dh) ** 0.5

    # ---- layer 0: build the activation in the VMEM carry -------------------
    @pl.when(l == 0)
    def _():
        if prologue:
            # patch-embed matmul (bias-free conv as matmul) + (cls,pos) add + ln_pre
            e = lax.dot_general(x_ref[...].astype(BF16), embw_ref[...].astype(BF16),
                                (((1,), (0,)), ((), ())),
                                preferred_element_type=F32)          # (R, D)
            e = e + add_ref[...].astype(F32)
            x_sc[...] = _ln(e, pre_g[...].astype(F32), pre_b[...].astype(F32))
        else:
            x_sc[...] = x_ref[...].astype(F32)

    x = x_sc[...]                                                     # (R, D) f32

    # ---- multi-head self-attention (pre-LN) --------------------------------
    h = _ln(x, ln1_g[0].astype(F32), ln1_b[0].astype(F32))
    qkv = lax.dot_general(h.astype(BF16), wqkv[0].astype(BF16),
                          (((1,), (0,)), ((), ())),
                          preferred_element_type=F32) + bqkv[0].astype(F32)  # (R, 3D)

    # Assemble (B_tile*heads, S, Dh) batches once; scores / PV are then two
    # batched MXU dot_generals instead of `heads` small matmuls + live head_outs.
    q_parts, k_parts, v_parts = [], [], []
    for b in range(BT):
        rows = qkv[b * S:(b + 1) * S]                                 # (S, 3D)
        for hh in range(H):
            q_parts.append(rows[:, hh * Dh:(hh + 1) * Dh])
            k_parts.append(rows[:, D + hh * Dh:D + (hh + 1) * Dh])
            v_parts.append(rows[:, 2 * D + hh * Dh:2 * D + (hh + 1) * Dh])
    qh = jnp.stack(q_parts, axis=0)                                   # (BT*H, S, Dh)
    kh = jnp.stack(k_parts, axis=0)
    vh = jnp.stack(v_parts, axis=0)

    s = lax.dot_general(qh.astype(BF16), kh.astype(BF16),
                        (((2,), (2,)), ((0,), (0,))),
                        preferred_element_type=F32) * scale           # (BT*H, S, S)
    if causal:
        row = lax.broadcasted_iota(jnp.int32, (S, S), 0)
        col = lax.broadcasted_iota(jnp.int32, (S, S), 1)
        s = s + jnp.where(col > row, -1e9, 0.0).astype(F32)[None]     # f32 mask
    s = s - jnp.max(s, axis=-1, keepdims=True)
    p = jnp.exp(s)
    p = p * pl.reciprocal(jnp.sum(p, axis=-1, keepdims=True), approx=True)
    ctx = lax.dot_general(p.astype(BF16), vh.astype(BF16),            # bf16 probs
                          (((2,), (1,)), ((0,), (0,))),
                          preferred_element_type=F32)                 # (BT*H, S, Dh)

    # merge heads back to (R, D) in the same column order as the weights
    outs = []
    for b in range(BT):
        outs.append(jnp.concatenate([ctx[b * H + hh] for hh in range(H)], axis=-1))
    merged = jnp.concatenate(outs, axis=0) if BT > 1 else outs[0]     # (R, D)

    attn = lax.dot_general(merged.astype(BF16), wo[0].astype(BF16),
                           (((1,), (0,)), ((), ())),
                           preferred_element_type=F32) + bo[0].astype(F32)
    x = x + attn

    # ---- MLP with QuickGELU (pre-LN) ----------------------------------------
    h2 = _ln(x, ln2_g[0].astype(F32), ln2_b[0].astype(F32))
    m = lax.dot_general(h2.astype(BF16), w1[0].astype(BF16),
                        (((1,), (0,)), ((), ())),
                        preferred_element_type=F32) + b1[0].astype(F32)
    m = m * jax.nn.sigmoid(1.702 * m)
    m = lax.dot_general(m.astype(BF16), w2[0].astype(BF16),
                        (((1,), (0,)), ((), ())),
                        preferred_element_type=F32) + b2[0].astype(F32)
    x = x + m

    x_sc[...] = x

    @pl.when(l == pl.num_programs(1) - 1)
    def _():
        o_ref[...] = x.astype(o_ref.dtype)


def fused_transformer(x2d, seq, lp, *, heads, causal, prologue=None, b_tile=8):
    """x2d: (B*seq, feat) rows. prologue=(conv_w, add(T,D), ln_g, ln_b) means feat
    is the flattened patch dim and the embed+ln_pre prologue runs in-kernel."""
    L, D = lp['in_proj_w'].shape[0], lp['in_proj_w'].shape[1]
    B = x2d.shape[0] // seq
    # TODO(synk): on v7x prefer a smaller b_tile (e.g. 4) and an MLP K-split at
    # real CLIP sizes; 8 amortizes weight streaming well on v5e/v6e.
    bt = _pick_tile(B, b_tile)
    rows_blk = bt * seq
    feat = x2d.shape[1]

    in_specs = [pl.BlockSpec((rows_blk, feat), lambda b, l: (b, 0))]
    inputs = [x2d]
    if prologue is not None:
        conv_w, add, ln_g, ln_b = prologue
        add_tiled = jnp.tile(add, (bt, 1))                            # (bt*T, D)
        for a in (conv_w, add_tiled, ln_g, ln_b):
            in_specs.append(pl.BlockSpec(a.shape, lambda b, l: (0, 0)))
            inputs.append(a)
    for name in ('ln1_g', 'ln1_b', 'in_proj_w', 'in_proj_b',
                 'out_proj_w', 'out_proj_b', 'ln2_g', 'ln2_b',
                 'mlp_w1', 'mlp_b1', 'mlp_w2', 'mlp_b2'):
        a = lp[name]
        in_specs.append(pl.BlockSpec((1,) + a.shape[1:], lambda b, l: (l, 0, 0)))
        inputs.append(a)

    kernel = functools.partial(_fused_block_kernel, heads=heads, seq=seq,
                               causal=causal, prologue=prologue is not None)
    out2d = pl.pallas_call(
        kernel,
        out_shape=jax.ShapeDtypeStruct((B * seq, D), F32),
        grid=(B // bt, L),
        in_specs=in_specs,
        out_specs=pl.BlockSpec((rows_blk, D), lambda b, l: (b, 0)),
        scratch_shapes=[pltpu.VMEM((rows_blk, D), F32)],
        compiler_params=pltpu.CompilerParams(
            dimension_semantics=("parallel", "arbitrary"),
            vmem_limit_bytes=64 * 1024 * 1024),
    )(*inputs)
    return out2d.reshape(B, seq, D)


# ---------------------------------------------------------------------------
# Head: ln_post+proj on CLS (image), ln_final+text_projection on EOT (text),
# L2 normalize, exp(logit_scale) * img @ txt.T.  Only (B,D)/(n_cls,D) rows
# reach this kernel; CLS/EOT selection is done outside.
# ---------------------------------------------------------------------------
def _head_kernel(scale_ref, img_ref, vg_ref, vb_ref, vproj_ref,
                 txt_ref, tg_ref, tb_ref, tproj_ref, o_ref):
    img = lax.dot_general(
        _ln(img_ref[...].astype(F32), vg_ref[...].astype(F32),
            vb_ref[...].astype(F32)).astype(BF16),
        vproj_ref[...].astype(BF16),
        (((1,), (0,)), ((), ())), preferred_element_type=F32)         # (B, E)
    txt = lax.dot_general(
        _ln(txt_ref[...].astype(F32), tg_ref[...].astype(F32),
            tb_ref[...].astype(F32)).astype(BF16),
        tproj_ref[...].astype(BF16),
        (((1,), (0,)), ((), ())), preferred_element_type=F32)         # (n_cls, E)
    img = img * lax.rsqrt(jnp.sum(img * img, axis=-1, keepdims=True))
    txt = txt * lax.rsqrt(jnp.sum(txt * txt, axis=-1, keepdims=True))
    logits = lax.dot_general(img, txt, (((1,), (1,)), ((), ())),
                             preferred_element_type=F32)
    o_ref[...] = (jnp.exp(scale_ref[0]) * logits).astype(o_ref.dtype)


def clip_head(img_cls, vp, txt_eot, tp, logit_scale):
    B = img_cls.shape[0]
    n_cls = txt_eot.shape[0]
    # TODO(synk): at real class counts, grid this over n_cls with a 128-lane
    # dense logits block; at toy scale a single block is already tiny.
    vspec = pl.BlockSpec(memory_space=VMEM)
    return pl.pallas_call(
        _head_kernel,
        out_shape=jax.ShapeDtypeStruct((B, n_cls), F32),
        in_specs=[pl.BlockSpec(memory_space=SMEM)] + [vspec] * 8,
        out_specs=vspec,
    )(jnp.asarray(logit_scale, F32).reshape(1),
      img_cls, vp['ln_post_g'], vp['ln_post_b'], vp['proj'],
      txt_eot, tp['ln_final_g'], tp['ln_final_b'], tp['text_projection'])


# ------------------------------ forward glue ------------------------------

def encode_image_tokens(image, vp, heads):
    # NCHW input; Conv2d(kernel=stride=patch, no bias) as a matmul over
    # flattened (C, ph, pw) patches; CLS handled by a zero "patch" row + add.
    B, C, H, W = image.shape
    p = vp['patch']
    gh, gw = H // p, W // p
    T = gh * gw + 1
    D = vp['conv_w'].shape[1]
    patches = image.reshape(B, C, gh, p, gw, p).transpose(0, 2, 4, 1, 3, 5)
    patches = patches.reshape(B, gh * gw, C * p * p)
    zeros = jnp.zeros((B, 1, patches.shape[-1]), patches.dtype)
    patches_ext = jnp.concatenate([zeros, patches], axis=1).reshape(B * T, C * p * p)
    cls_row = jnp.concatenate(
        [vp['class_emb'].reshape(1, D).astype(F32), jnp.zeros((gh * gw, D), F32)],
        axis=0)
    add = cls_row + vp['pos_emb']                                    # (T, D)
    prologue = (vp['conv_w'], add, vp['ln_pre_g'], vp['ln_pre_b'])
    return fused_transformer(patches_ext, T, vp['layers'], heads=heads,
                             causal=False, prologue=prologue)        # (B, T, D)


def encode_text_tokens(pp, tp, heads):
    # PromptLearner forward (class_token_position == 'end')
    ctx = pp['ctx']
    n_cls = pp['token_prefix'].shape[0]
    ctx = jnp.broadcast_to(ctx[None], (n_cls,) + ctx.shape)
    prompts = jnp.concatenate([pp['token_prefix'], ctx, pp['token_suffix']], axis=1)
    x = prompts + tp['pos_emb'][None]                                # (n_cls, S, D)
    S, D = x.shape[1], x.shape[2]
    return fused_transformer(x.reshape(n_cls * S, D), S, tp['layers'],
                             heads=heads, causal=True)               # (n_cls, S, D)


def custom_clip_forward(image, params):
    vp, tp, pp = params['visual'], params['text'], params['prompt_learner']
    image_tokens = encode_image_tokens(image, vp, params['visual_heads'])
    text_tokens = encode_text_tokens(pp, tp, params['text_heads'])
    img_cls = image_tokens[:, 0, :]                                  # (B, D)
    eot = jnp.argmax(pp['tokenized_prompts'], axis=-1)               # (n_cls,)
    txt_eot = jnp.take_along_axis(text_tokens, eot[:, None, None], axis=1)[:, 0, :]
    return clip_head(img_cls, vp, txt_eot, tp, params['logit_scale'])


# ------------------------------ parameter init ------------------------------

def make_stacked_layers(key, n_layers, width):
    ks = jax.random.split(key, 4)
    s = 0.02
    return {
        'ln1_g': jnp.ones((n_layers, 1, width), F32),
        'ln1_b': jnp.zeros((n_layers, 1, width), F32),
        'ln2_g': jnp.ones((n_layers, 1, width), F32),
        'ln2_b': jnp.zeros((n_layers, 1, width), F32),
        # matmul weights stored bf16 (MXU operands); biases / LN stay f32
        'in_proj_w': (s * jax.random.normal(ks[0], (n_layers, width, 3 * width), F32)).astype(BF16),
        'in_proj_b': jnp.zeros((n_layers, 1, 3 * width), F32),
        'out_proj_w': (s * jax.random.normal(ks[1], (n_layers, width, width), F32)).astype(BF16),
        'out_proj_b': jnp.zeros((n_layers, 1, width), F32),
        'mlp_w1': (s * jax.random.normal(ks[2], (n_layers, width, 4 * width), F32)).astype(BF16),
        'mlp_b1': jnp.zeros((n_layers, 1, 4 * width), F32),
        'mlp_w2': (s * jax.random.normal(ks[3], (n_layers, 4 * width, width), F32)).astype(BF16),
        'mlp_b2': jnp.zeros((n_layers, 1, width), F32),
    }


def build_params(key):
    embed_dim = 32
    v_width, v_layers, v_heads, image_res, patch = 32, 2, 4, 16, 8
    n_patches = (image_res // patch) ** 2
    ctx_dim, t_layers, t_heads, context_len = 32, 2, 4, 8
    n_cls, n_ctx = 3, 4

    keys = jax.random.split(key, 12)
    s = 0.02

    visual = {
        'patch': patch,
        'conv_w': (s * jax.random.normal(keys[0], (3 * patch * patch, v_width), F32)).astype(BF16),
        'class_emb': s * jax.random.normal(keys[1], (v_width,), F32),
        'pos_emb': s * jax.random.normal(keys[2], (n_patches + 1, v_width), F32),
        'ln_pre_g': jnp.ones((1, v_width), F32),
        'ln_pre_b': jnp.zeros((1, v_width), F32),
        'ln_post_g': jnp.ones((1, v_width), F32),
        'ln_post_b': jnp.zeros((1, v_width), F32),
        'proj': (s * jax.random.normal(keys[3], (v_width, embed_dim), F32)).astype(BF16),
        'layers': make_stacked_layers(keys[4], v_layers, v_width),
    }

    text = {
        'pos_emb': s * jax.random.normal(keys[5], (context_len, ctx_dim), F32),
        'ln_final_g': jnp.ones((1, ctx_dim), F32),
        'ln_final_b': jnp.zeros((1, ctx_dim), F32),
        'text_projection': (s * jax.random.normal(keys[6], (ctx_dim, embed_dim), F32)).astype(BF16),
        'layers': make_stacked_layers(keys[7], t_layers, ctx_dim),
    }

    # PromptLearner buffers (synthetic token embeddings, class_token_position='end')
    # TODO(synk): the CLIP BPE tokenizer + token_embedding lookup have no Pallas
    # equivalent; they are represented by these precomputed buffers.
    n_suffix = context_len - 1 - n_ctx
    tokenized = np.zeros((n_cls, context_len), np.int32)
    tokenized[:, 0] = 49406                        # SOS
    tokenized[:, 1:1 + n_ctx] = 343                # "X X X X" placeholder ctx tokens
    for i in range(n_cls):
        tokenized[i, 1 + n_ctx] = 1000 + i         # class-name token (name_len=1)
        tokenized[i, 1 + n_ctx + 1] = 49407        # EOT -> argmax picks this position
    prompt_learner = {
        'ctx': s * jax.random.normal(keys[8], (n_ctx, ctx_dim), F32),
        'token_prefix': s * jax.random.normal(keys[9], (n_cls, 1, ctx_dim), F32),
        'token_suffix': s * jax.random.normal(keys[10], (n_cls, n_suffix, ctx_dim), F32),
        'tokenized_prompts': jnp.asarray(tokenized),
    }

    return {
        'visual': visual, 'text': text, 'prompt_learner': prompt_learner,
        'visual_heads': v_heads, 'text_heads': t_heads,
        'logit_scale': float(np.log(1.0 / 0.07)),
    }


# ----------------------------------- main -----------------------------------

if __name__ == "__main__":
    key = jax.random.PRNGKey(0)
    k_params, k_img = jax.random.split(key)
    params = build_params(k_params)
    image = jax.random.normal(k_img, (2, 3, 16, 16), F32)   # NCHW like PyTorch

    logits = custom_clip_forward(image, params)
    jax.block_until_ready(logits)
    assert logits.shape == (2, 3), logits.shape
    assert bool(jnp.all(jnp.isfinite(logits)))
    print("KERNEL_OK")
</pallas_src>

<mosaic_0001>
module attributes {stable_mosaic.version = 11 : i64} {
  func.func @_fused_block_kernel(%arg0: i32, %arg1: i32, %arg2: memref<10x192xf32, #tpu.memory_space<vmem>>, %arg3: memref<192x32xbf16, #tpu.memory_space<vmem>>, %arg4: memref<10x32xf32, #tpu.memory_space<vmem>>, %arg5: memref<1x32xf32, #tpu.memory_space<vmem>>, %arg6: memref<1x32xf32, #tpu.memory_space<vmem>>, %arg7: memref<1x1x32xf32, #tpu.memory_space<vmem>>, %arg8: memref<1x1x32xf32, #tpu.memory_space<vmem>>, %arg9: memref<1x32x96xbf16, #tpu.memory_space<vmem>>, %arg10: memref<1x1x96xf32, #tpu.memory_space<vmem>>, %arg11: memref<1x32x32xbf16, #tpu.memory_space<vmem>>, %arg12: memref<1x1x32xf32, #tpu.memory_space<vmem>>, %arg13: memref<1x1x32xf32, #tpu.memory_space<vmem>>, %arg14: memref<1x1x32xf32, #tpu.memory_space<vmem>>, %arg15: memref<1x32x128xbf16, #tpu.memory_space<vmem>>, %arg16: memref<1x1x128xf32, #tpu.memory_space<vmem>>, %arg17: memref<1x128x32xbf16, #tpu.memory_space<vmem>>, %arg18: memref<1x1x32xf32, #tpu.memory_space<vmem>>, %arg19: memref<10x32xf32, #tpu.memory_space<vmem>>, %arg20: memref<10x32xf32, #tpu.memory_space<vmem>>) attributes {dimension_semantics = [#tpu.dimension_semantics<parallel>, #tpu.dimension_semantics<arbitrary>], iteration_bounds = array<i64: 1, 2>, scalar_prefetch = 0 : i64, scratch_operands = 1 : i64, tpu.core_type = #tpu.core_type<tc>, window_params = [{transform_indices = @transform_0, window_bounds = array<i64: 10, 192>}, {pipeline_mode = #tpu.pipeline_mode<synchronous>, transform_indices = @transform_1, window_bounds = array<i64: 192, 32>}, {pipeline_mode = #tpu.pipeline_mode<synchronous>, transform_indices = @transform_2, window_bounds = array<i64: 10, 32>}, {pipeline_mode = #tpu.pipeline_mode<synchronous>, transform_indices = @transform_3, window_bounds = array<i64: 1, 32>}, {pipeline_mode = #tpu.pipeline_mode<synchronous>, transform_indices = @transform_4, window_bounds = array<i64: 1, 32>}, {transform_indices = @transform_5, window_bounds = array<i64: 1, 1, 32>}, {transform_indices = @transform_6, window_bounds = array<i64: 1, 1, 32>}, {transform_indices = @transform_7, window_bounds = array<i64: 1, 32, 96>}, {transform_indices = @transform_8, window_bounds = array<i64: 1, 1, 96>}, {transform_indices = @transform_9, window_bounds = array<i64: 1, 32, 32>}, {transform_indices = @transform_10, window_bounds = array<i64: 1, 1, 32>}, {transform_indices = @transform_11, window_bounds = array<i64: 1, 1, 32>}, {transform_indices = @transform_12, window_bounds = array<i64: 1, 1, 32>}, {transform_indices = @transform_13, window_bounds = array<i64: 1, 32, 128>}, {transform_indices = @transform_14, window_bounds = array<i64: 1, 1, 128>}, {transform_indices = @transform_15, window_bounds = array<i64: 1, 128, 32>}, {transform_indices = @transform_16, window_bounds = array<i64: 1, 1, 32>}, {transform_indices = @transform_17, window_bounds = array<i64: 10, 32>}]} {
    %c0_i32 = arith.constant 0 : i32
    %0 = arith.cmpi eq, %arg1, %c0_i32 : i32
    %1 = arith.extui %0 : i1 to i32
    %c0_i32_0 = arith.constant 0 : i32
    %2 = arith.cmpi ne, %1, %c0_i32_0 : i32
    scf.if %2 {
      %c0_61 = arith.constant 0 : index
      %c0_62 = arith.constant 0 : index
      %192 = vector.load %arg2[%c0_61, %c0_62] : memref<10x192xf32, #tpu.memory_space<vmem>>, vector<10x192xf32>
      %193 = arith.truncf %192 : vector<10x192xf32> to vector<10x192xbf16>
      %c0_63 = arith.constant 0 : index
      %c0_64 = arith.constant 0 : index
      %194 = vector.load %arg3[%c0_63, %c0_64] : memref<192x32xbf16, #tpu.memory_space<vmem>>, vector<192x32xbf16>
      %cst_65 = arith.constant dense<0.000000e+00> : vector<10x32xf32>
      %195 = tpu.matmul %193, %194, %cst_65 {dimension_numbers = #tpu.dot_dimension_numbers<[1], [0], [0], [1], [0, 0, 1, 1], [], []>} : vector<10x192xbf16>, vector<192x32xbf16>, vector<10x32xf32> -> vector<10x32xf32>
      %c0_66 = arith.constant 0 : index
      %c0_67 = arith.constant 0 : index
      %196 = vector.load %arg4[%c0_66, %c0_67] : memref<10x32xf32, #tpu.memory_space<vmem>>, vector<10x32xf32>
      %197 = arith.addf %195, %196 : vector<10x32xf32>
      %c0_68 = arith.constant 0 : index
      %c0_69 = arith.constant 0 : index
      %198 = vector.load %arg5[%c0_68, %c0_69] : memref<1x32xf32, #tpu.memory_space<vmem>>, vector<1x32xf32>
      %c0_70 = arith.constant 0 : index
      %c0_71 = arith.constant 0 : index
      %199 = vector.load %arg6[%c0_70, %c0_71] : memref<1x32xf32, #tpu.memory_space<vmem>>, vector<1x32xf32>
      %cst_72 = arith.constant dense<0.000000e+00> : vector<10xf32>
      %200 = vector.multi_reduction <add>, %197, %cst_72 [1] : vector<10x32xf32> to vector<10xf32>
      %201 = vector.shape_cast %200 : vector<10xf32> to vector<10x1xf32>
      %cst_73 = arith.constant 3.200000e+01 : f32
      %202 = vector.broadcast %cst_73 : f32 to vector<10x1xf32>
      %203 = arith.divf %201, %202 : vector<10x1xf32>
      %204 = vector.broadcast %203 : vector<10x1xf32> to vector<10x32xf32>
      %205 = arith.subf %197, %204 : vector<10x32xf32>
      %206 = arith.mulf %205, %205 : vector<10x32xf32>
      %cst_74 = arith.constant dense<0.000000e+00> : vector<10xf32>
      %207 = vector.multi_reduction <add>, %206, %cst_74 [1] : vector<10x32xf32> to vector<10xf32>
      %208 = vector.shape_cast %207 : vector<10xf32> to vector<10x1xf32>
      %cst_75 = arith.constant 3.200000e+01 : f32
      %209 = vector.broadcast %cst_75 : f32 to vector<10x1xf32>
      %210 = arith.divf %208, %209 : vector<10x1xf32>
      %211 = vector.broadcast %203 : vector<10x1xf32> to vector<10x32xf32>
      %212 = arith.subf %197, %211 : vector<10x32xf32>
      %cst_76 = arith.constant 9.99999974E-6 : f32
      %213 = vector.broadcast %cst_76 : f32 to vector<10x1xf32>
      %214 = arith.addf %210, %213 : vector<10x1xf32>
      %215 = math.rsqrt %214 : vector<10x1xf32>
      %216 = vector.broadcast %215 : vector<10x1xf32> to vector<10x32xf32>
      %217 = arith.mulf %212, %216 : vector<10x32xf32>
      %218 = vector.broadcast %198 : vector<1x32xf32> to vector<10x32xf32>
      %219 = arith.mulf %217, %218 : vector<10x32xf32>
      %220 = vector.broadcast %199 : vector<1x32xf32> to vector<10x32xf32>
      %221 = arith.addf %219, %220 : vector<10x32xf32>
      %c0_77 = arith.constant 0 : index
      %c0_78 = arith.constant 0 : index
      %222 = vector.load %arg20[%c0_77, %c0_78] : memref<10x32xf32, #tpu.memory_space<vmem>>, vector<10x32xf32>
      tpu.vector_store %arg20[%c0_77, %c0_78], %221 {strides = array<i32>} : memref<10x32xf32, #tpu.memory_space<vmem>>, vector<10x32xf32>,
    } else {
    }
    %c0 = arith.constant 0 : index
    %c0_1 = arith.constant 0 : index
    %3 = vector.load %arg20[%c0, %c0_1] : memref<10x32xf32, #tpu.memory_space<vmem>>, vector<10x32xf32>
    %c0_2 = arith.constant 0 : index
    %c0_3 = arith.constant 0 : index
    %c0_4 = arith.constant 0 : index
    %4 = vector.load %arg7[%c0_2, %c0_3, %c0_4] : memref<1x1x32xf32, #tpu.memory_space<vmem>>, vector<1x1x32xf32>
    %5 = vector.shape_cast %4 : vector<1x1x32xf32> to vector<1x32xf32>
    %c0_5 = arith.constant 0 : index
    %c0_6 = arith.constant 0 : index
    %c0_7 = arith.constant 0 : index
    %6 = vector.load %arg8[%c0_5, %c0_6, %c0_7] : memref<1x1x32xf32, #tpu.memory_space<vmem>>, vector<1x1x32xf32>
    %7 = vector.shape_cast %6 : vector<1x1x32xf32> to vector<1x32xf32>
    %cst = arith.constant dense<0.000000e+00> : vector<10xf32>
    %8 = vector.multi_reduction <add>, %3, %cst [1] : vector<10x32xf32> to vector<10xf32>
    %9 = vector.shape_cast %8 : vector<10xf32> to vector<10x1xf32>
    %cst_8 = arith.constant 3.200000e+01 : f32
    %10 = vector.broadcast %cst_8 : f32 to vector<10x1xf32>
    %11 = arith.divf %9, %10 : vector<10x1xf32>
    %12 = vector.broadcast %11 : vector<10x1xf32> to vector<10x32xf32>
    %13 = arith.subf %3, %12 : vector<10x32xf32>
    %14 = arith.mulf %13, %13 : vector<10x32xf32>
    %cst_9 = arith.constant dense<0.000000e+00> : vector<10xf32>
    %15 = vector.multi_reduction <add>, %14, %cst_9 [1] : vector<10x32xf32> to vector<10xf32>
    %16 = vector.shape_cast %15 : vector<10xf32> to vector<10x1xf32>
    %cst_10 = arith.constant 3.200000e+01 : f32
    %17 = vector.broadcast %cst_10 : f32 to vector<10x1xf32>
    %18 = arith.divf %16, %17 : vector<10x1xf32>
    %19 = vector.broadcast %11 : vector<10x1xf32> to vector<10x32xf32>
    %20 = arith.subf %3, %19 : vector<10x32xf32>
    %cst_11 = arith.constant 9.99999974E-6 : f32
    %21 = vector.broadcast %cst_11 : f32 to vector<10x1xf32>
    %22 = arith.addf %18, %21 : vector<10x1xf32>
    %23 = math.rsqrt %22 : vector<10x1xf32>
    %24 = vector.broadcast %23 : vector<10x1xf32> to vector<10x32xf32>
    %25 = arith.mulf %20, %24 : vector<10x32xf32>
    %26 = vector.broadcast %5 : vector<1x32xf32> to vector<10x32xf32>
    %27 = arith.mulf %25, %26 : vector<10x32xf32>
    %28 = vector.broadcast %7 : vector<1x32xf32> to vector<10x32xf32>
    %29 = arith.addf %27, %28 : vector<10x32xf32>
    %30 = arith.truncf %29 : vector<10x32xf32> to vector<10x32xbf16>
    %c0_12 = arith.constant 0 : index
    %c0_13 = arith.constant 0 : index
    %c0_14 = arith.constant 0 : index
    %31 = vector.load %arg9[%c0_12, %c0_13, %c0_14] : memref<1x32x96xbf16, #tpu.memory_space<vmem>>, vector<1x32x96xbf16>
    %32 = vector.shape_cast %31 : vector<1x32x96xbf16> to vector<32x96xbf16>
    %cst_15 = arith.constant dense<0.000000e+00> : vector<10x96xf32>
    %33 = tpu.matmul %30, %32, %cst_15 {dimension_numbers = #tpu.dot_dimension_numbers<[1], [0], [0], [1], [0, 0, 1, 1], [], []>} : vector<10x32xbf16>, vector<32x96xbf16>, vector<10x96xf32> -> vector<10x96xf32>
    %c0_16 = arith.constant 0 : index
    %c0_17 = arith.constant 0 : index
    %c0_18 = arith.constant 0 : index
    %34 = vector.load %arg10[%c0_16, %c0_17, %c0_18] : memref<1x1x96xf32, #tpu.memory_space<vmem>>, vector<1x1x96xf32>
    %35 = vector.shape_cast %34 : vector<1x1x96xf32> to vector<1x96xf32>
    %36 = vector.broadcast %35 : vector<1x96xf32> to vector<10x96xf32>
    %37 = arith.addf %33, %36 : vector<10x96xf32>
    %38 = vector.extract_strided_slice %37 {offsets = [0, 0], sizes = [5, 96], strides = [1, 1]} : vector<10x96xf32> to vector<5x96xf32>
    %39 = vector.extract_strided_slice %38 {offsets = [0, 0], sizes = [5, 8], strides = [1, 1]} : vector<5x96xf32> to vector<5x8xf32>
    %40 = vector.extract_strided_slice %38 {offsets = [0, 32], sizes = [5, 8], strides = [1, 1]} : vector<5x96xf32> to vector<5x8xf32>
    %41 = vector.extract_strided_slice %38 {offsets = [0, 64], sizes = [5, 8], strides = [1, 1]} : vector<5x96xf32> to vector<5x8xf32>
    %42 = vector.extract_strided_slice %38 {offsets = [0, 8], sizes = [5, 8], strides = [1, 1]} : vector<5x96xf32> to vector<5x8xf32>
    %43 = vector.extract_strided_slice %38 {offsets = [0, 40], sizes = [5, 8], strides = [1, 1]} : vector<5x96xf32> to vector<5x8xf32>
    %44 = vector.extract_strided_slice %38 {offsets = [0, 72], sizes = [5, 8], strides = [1, 1]} : vector<5x96xf32> to vector<5x8xf32>
    %45 = vector.extract_strided_slice %38 {offsets = [0, 16], sizes = [5, 8], strides = [1, 1]} : vector<5x96xf32> to vector<5x8xf32>
    %46 = vector.extract_strided_slice %38 {offsets = [0, 48], sizes = [5, 8], strides = [1, 1]} : vector<5x96xf32> to vector<5x8xf32>
    %47 = vector.extract_strided_slice %38 {offsets = [0, 80], sizes = [5, 8], strides = [1, 1]} : vector<5x96xf32> to vector<5x8xf32>
    %48 = vector.extract_strided_slice %38 {offsets = [0, 24], sizes = [5, 8], strides = [1, 1]} : vector<5x96xf32> to vector<5x8xf32>
    %49 = vector.extract_strided_slice %38 {offsets = [0, 56], sizes = [5, 8], strides = [1, 1]} : vector<5x96xf32> to vector<5x8xf32>
    %50 = vector.extract_strided_slice %38 {offsets = [0, 88], sizes = [5, 8], strides = [1, 1]} : vector<5x96xf32> to vector<5x8xf32>
    %51 = vector.extract_strided_slice %37 {offsets = [5, 0], sizes = [5, 96], strides = [1, 1]} : vector<10x96xf32> to vector<5x96xf32>
    %52 = vector.extract_strided_slice %51 {offsets = [0, 0], sizes = [5, 8], strides = [1, 1]} : vector<5x96xf32> to vector<5x8xf32>
    %53 = vector.extract_strided_slice %51 {offsets = [0, 32], sizes = [5, 8], strides = [1, 1]} : vector<5x96xf32> to vector<5x8xf32>
    %54 = vector.extract_strided_slice %51 {offsets = [0, 64], sizes = [5, 8], strides = [1, 1]} : vector<5x96xf32> to vector<5x8xf32>
    %55 = vector.extract_strided_slice %51 {offsets = [0, 8], sizes = [5, 8], strides = [1, 1]} : vector<5x96xf32> to vector<5x8xf32>
    %56 = vector.extract_strided_slice %51 {offsets = [0, 40], sizes = [5, 8], strides = [1, 1]} : vector<5x96xf32> to vector<5x8xf32>
    %57 = vector.extract_strided_slice %51 {offsets = [0, 72], sizes = [5, 8], strides = [1, 1]} : vector<5x96xf32> to vector<5x8xf32>
    %58 = vector.extract_strided_slice %51 {offsets = [0, 16], sizes = [5, 8], strides = [1, 1]} : vector<5x96xf32> to vector<5x8xf32>
    %59 = vector.extract_strided_slice %51 {offsets = [0, 48], sizes = [5, 8], strides = [1, 1]} : vector<5x96xf32> to vector<5x8xf32>
    %60 = vector.extract_strided_slice %51 {offsets = [0, 80], sizes = [5, 8], strides = [1, 1]} : vector<5x96xf32> to vector<5x8xf32>
    %61 = vector.extract_strided_slice %51 {offsets = [0, 24], sizes = [5, 8], strides = [1, 1]} : vector<5x96xf32> to vector<5x8xf32>
    %62 = vector.extract_strided_slice %51 {offsets = [0, 56], sizes = [5, 8], strides = [1, 1]} : vector<5x96xf32> to vector<5x8xf32>
    %63 = vector.extract_strided_slice %51 {offsets = [0, 88], sizes = [5, 8], strides = [1, 1]} : vector<5x96xf32> to vector<5x8xf32>
    %64 = vector.shape_cast %39 : vector<5x8xf32> to vector<1x5x8xf32>
    %65 = vector.shape_cast %42 : vector<5x8xf32> to vector<1x5x8xf32>
    %66 = vector.shape_cast %45 : vector<5x8xf32> to vector<1x5x8xf32>
    %67 = vector.shape_cast %48 : vector<5x8xf32> to vector<1x5x8xf32>
    %68 = vector.shape_cast %52 : vector<5x8xf32> to vector<1x5x8xf32>
    %69 = vector.shape_cast %55 : vector<5x8xf32> to vector<1x5x8xf32>
    %70 = vector.shape_cast %58 : vector<5x8xf32> to vector<1x5x8xf32>
    %71 = vector.shape_cast %61 : vector<5x8xf32> to vector<1x5x8xf32>
    %72 = tpu.concatenate %64, %65, %66, %67, %68, %69, %70, %71 in 0 : vector<1x5x8xf32>, vector<1x5x8xf32>, vector<1x5x8xf32>, vector<1x5x8xf32>, vector<1x5x8xf32>, vector<1x5x8xf32>, vector<1x5x8xf32>, vector<1x5x8xf32> -> vector<8x5x8xf32>
    %73 = vector.shape_cast %40 : vector<5x8xf32> to vector<1x5x8xf32>
    %74 = vector.shape_cast %43 : vector<5x8xf32> to vector<1x5x8xf32>
    %75 = vector.shape_cast %46 : vector<5x8xf32> to vector<1x5x8xf32>
    %76 = vector.shape_cast %49 : vector<5x8xf32> to vector<1x5x8xf32>
    %77 = vector.shape_cast %53 : vector<5x8xf32> to vector<1x5x8xf32>
    %78 = vector.shape_cast %56 : vector<5x8xf32> to vector<1x5x8xf32>
    %79 = vector.shape_cast %59 : vector<5x8xf32> to vector<1x5x8xf32>
    %80 = vector.shape_cast %62 : vector<5x8xf32> to vector<1x5x8xf32>
    %81 = tpu.concatenate %73, %74, %75, %76, %77, %78, %79, %80 in 0 : vector<1x5x8xf32>, vector<1x5x8xf32>, vector<1x5x8xf32>, vector<1x5x8xf32>, vector<1x5x8xf32>, vector<1x5x8xf32>, vector<1x5x8xf32>, vector<1x5x8xf32> -> vector<8x5x8xf32>
    %82 = vector.shape_cast %41 : vector<5x8xf32> to vector<1x5x8xf32>
    %83 = vector.shape_cast %44 : vector<5x8xf32> to vector<1x5x8xf32>
    %84 = vector.shape_cast %47 : vector<5x8xf32> to vector<1x5x8xf32>
    %85 = vector.shape_cast %50 : vector<5x8xf32> to vector<1x5x8xf32>
    %86 = vector.shape_cast %54 : vector<5x8xf32> to vector<1x5x8xf32>
    %87 = vector.shape_cast %57 : vector<5x8xf32> to vector<1x5x8xf32>
    %88 = vector.shape_cast %60 : vector<5x8xf32> to vector<1x5x8xf32>
    %89 = vector.shape_cast %63 : vector<5x8xf32> to vector<1x5x8xf32>
    %90 = tpu.concatenate %82, %83, %84, %85, %86, %87, %88, %89 in 0 : vector<1x5x8xf32>, vector<1x5x8xf32>, vector<1x5x8xf32>, vector<1x5x8xf32>, vector<1x5x8xf32>, vector<1x5x8xf32>, vector<1x5x8xf32>, vector<1x5x8xf32> -> vector<8x5x8xf32>
    %91 = arith.truncf %72 : vector<8x5x8xf32> to vector<8x5x8xbf16>
    %92 = arith.truncf %81 : vector<8x5x8xf32> to vector<8x5x8xbf16>
    %cst_19 = arith.constant dense<0.000000e+00> : vector<8x5x5xf32>
    %93 = tpu.matmul %91, %92, %cst_19 {dimension_numbers = #tpu.dot_dimension_numbers<[2], [2], [1], [1], [0, 0, 0, 1, 1, 1], [0], [0]>} : vector<8x5x8xbf16>, vector<8x5x8xbf16>, vector<8x5x5xf32> -> vector<8x5x5xf32>
    %cst_20 = arith.constant 0.353553385 : f32
    %94 = vector.broadcast %cst_20 : f32 to vector<8x5x5xf32>
    %95 = arith.mulf %93, %94 : vector<8x5x5xf32>
    %cst_21 = arith.constant dense<0xFF800000> : vector<8x5xf32>
    %96 = vector.multi_reduction <maximumf>, %95, %cst_21 [2] : vector<8x5x5xf32> to vector<8x5xf32>
    %97 = vector.shape_cast %96 : vector<8x5xf32> to vector<8x5x1xf32>
    %98 = vector.broadcast %97 : vector<8x5x1xf32> to vector<8x5x5xf32>
    %99 = arith.subf %95, %98 : vector<8x5x5xf32>
    %100 = math.exp %99 : vector<8x5x5xf32>
    %cst_22 = arith.constant dense<0.000000e+00> : vector<8x5xf32>
    %101 = vector.multi_reduction <add>, %100, %cst_22 [2] : vector<8x5x5xf32> to vector<8x5xf32>
    %102 = vector.shape_cast %101 : vector<8x5xf32> to vector<8x5x1xf32>
    %103 = tpu.reciprocal %102 {approx = true} : vector<8x5x1xf32> -> vector<8x5x1xf32>
    %104 = vector.broadcast %103 : vector<8x5x1xf32> to vector<8x5x5xf32>
    %105 = arith.mulf %100, %104 : vector<8x5x5xf32>
    %106 = arith.truncf %105 : vector<8x5x5xf32> to vector<8x5x5xbf16>
    %107 = arith.truncf %90 : vector<8x5x8xf32> to vector<8x5x8xbf16>
    %cst_23 = arith.constant dense<0.000000e+00> : vector<8x5x8xf32>
    %108 = tpu.matmul %106, %107, %cst_23 {dimension_numbers = #tpu.dot_dimension_numbers<[2], [1], [1], [2], [0, 0, 0, 1, 1, 2], [0], [0]>} : vector<8x5x5xbf16>, vector<8x5x8xbf16>, vector<8x5x8xf32> -> vector<8x5x8xf32>
    %109 = vector.extract_strided_slice %108 {offsets = [0, 0, 0], sizes = [1, 5, 8], strides = [1, 1, 1]} : vector<8x5x8xf32> to vector<1x5x8xf32>
    %110 = vector.shape_cast %109 : vector<1x5x8xf32> to vector<5x8xf32>
    %111 = vector.extract_strided_slice %108 {offsets = [1, 0, 0], sizes = [1, 5, 8], strides = [1, 1, 1]} : vector<8x5x8xf32> to vector<1x5x8xf32>
    %112 = vector.shape_cast %111 : vector<1x5x8xf32> to vector<5x8xf32>
    %113 = vector.extract_strided_slice %108 {offsets = [2, 0, 0], sizes = [1, 5, 8], strides = [1, 1, 1]} : vector<8x5x8xf32> to vector<1x5x8xf32>
    %114 = vector.shape_cast %113 : vector<1x5x8xf32> to vector<5x8xf32>
    %115 = vector.extract_strided_slice %108 {offsets = [3, 0, 0], sizes = [1, 5, 8], strides = [1, 1, 1]} : vector<8x5x8xf32> to vector<1x5x8xf32>
    %116 = vector.shape_cast %115 : vector<1x5x8xf32> to vector<5x8xf32>
    %117 = tpu.concatenate %110, %112, %114, %116 in 1 : vector<5x8xf32>, vector<5x8xf32>, vector<5x8xf32>, vector<5x8xf32> -> vector<5x32xf32>
    %118 = vector.extract_strided_slice %108 {offsets = [4, 0, 0], sizes = [1, 5, 8], strides = [1, 1, 1]} : vector<8x5x8xf32> to vector<1x5x8xf32>
    %119 = vector.shape_cast %118 : vector<1x5x8xf32> to vector<5x8xf32>
    %120 = vector.extract_strided_slice %108 {offsets = [5, 0, 0], sizes = [1, 5, 8], strides = [1, 1, 1]} : vector<8x5x8xf32> to vector<1x5x8xf32>
    %121 = vector.shape_cast %120 : vector<1x5x8xf32> to vector<5x8xf32>
    %122 = vector.extract_strided_slice %108 {offsets = [6, 0, 0], sizes = [1, 5, 8], strides = [1, 1, 1]} : vector<8x5x8xf32> to vector<1x5x8xf32>
    %123 = vector.shape_cast %122 : vector<1x5x8xf32> to vector<5x8xf32>
    %124 = vector.extract_strided_slice %108 {offsets = [7, 0, 0], sizes = [1, 5, 8], strides = [1, 1, 1]} : vector<8x5x8xf32> to vector<1x5x8xf32>
    %125 = vector.shape_cast %124 : vector<1x5x8xf32> to vector<5x8xf32>
    %126 = tpu.concatenate %119, %121, %123, %125 in 1 : vector<5x8xf32>, vector<5x8xf32>, vector<5x8xf32>, vector<5x8xf32> -> vector<5x32xf32>
    %127 = tpu.concatenate %117, %126 in 0 : vector<5x32xf32>, vector<5x32xf32> -> vector<10x32xf32>
    %128 = arith.truncf %127 : vector<10x32xf32> to vector<10x32xbf16>
    %c0_24 = arith.constant 0 : index
    %c0_25 = arith.constant 0 : index
    %c0_26 = arith.constant 0 : index
    %129 = vector.load %arg11[%c0_24, %c0_25, %c0_26] : memref<1x32x32xbf16, #tpu.memory_space<vmem>>, vector<1x32x32xbf16>
    %130 = vector.shape_cast %129 : vector<1x32x32xbf16> to vector<32x32xbf16>
    %cst_27 = arith.constant dense<0.000000e+00> : vector<10x32xf32>
    %131 = tpu.matmul %128, %130, %cst_27 {dimension_numbers = #tpu.dot_dimension_numbers<[1], [0], [0], [1], [0, 0, 1, 1], [], []>} : vector<10x32xbf16>, vector<32x32xbf16>, vector<10x32xf32> -> vector<10x32xf32>
    %c0_28 = arith.constant 0 : index
    %c0_29 = arith.constant 0 : index
    %c0_30 = arith.constant 0 : index
    %132 = vector.load %arg12[%c0_28, %c0_29, %c0_30] : memref<1x1x32xf32, #tpu.memory_space<vmem>>, vector<1x1x32xf32>
    %133 = vector.shape_cast %132 : vector<1x1x32xf32> to vector<1x32xf32>
    %134 = vector.broadcast %133 : vector<1x32xf32> to vector<10x32xf32>
    %135 = arith.addf %131, %134 : vector<10x32xf32>
    %136 = arith.addf %3, %135 : vector<10x32xf32>
    %c0_31 = arith.constant 0 : index
    %c0_32 = arith.constant 0 : index
    %c0_33 = arith.constant 0 : index
    %137 = vector.load %arg13[%c0_31, %c0_32, %c0_33] : memref<1x1x32xf32, #tpu.memory_space<vmem>>, vector<1x1x32xf32>
    %138 = vector.shape_cast %137 : vector<1x1x32xf32> to vector<1x32xf32>
    %c0_34 = arith.constant 0 : index
    %c0_35 = arith.constant 0 : index
    %c0_36 = arith.constant 0 : index
    %139 = vector.load %arg14[%c0_34, %c0_35, %c0_36] : memref<1x1x32xf32, #tpu.memory_space<vmem>>, vector<1x1x32xf32>
    %140 = vector.shape_cast %139 : vector<1x1x32xf32> to vector<1x32xf32>
    %cst_37 = arith.constant dense<0.000000e+00> : vector<10xf32>
    %141 = vector.multi_reduction <add>, %136, %cst_37 [1] : vector<10x32xf32> to vector<10xf32>
    %142 = vector.shape_cast %141 : vector<10xf32> to vector<10x1xf32>
    %cst_38 = arith.constant 3.200000e+01 : f32
    %143 = vector.broadcast %cst_38 : f32 to vector<10x1xf32>
    %144 = arith.divf %142, %143 : vector<10x1xf32>
    %145 = vector.broadcast %144 : vector<10x1xf32> to vector<10x32xf32>
    %146 = arith.subf %136, %145 : vector<10x32xf32>
    %147 = arith.mulf %146, %146 : vector<10x32xf32>
    %cst_39 = arith.constant dense<0.000000e+00> : vector<10xf32>
    %148 = vector.multi_reduction <add>, %147, %cst_39 [1] : vector<10x32xf32> to vector<10xf32>
    %149 = vector.shape_cast %148 : vector<10xf32> to vector<10x1xf32>
    %cst_40 = arith.constant 3.200000e+01 : f32
    %150 = vector.broadcast %cst_40 : f32 to vector<10x1xf32>
    %151 = arith.divf %149, %150 : vector<10x1xf32>
    %152 = vector.broadcast %144 : vector<10x1xf32> to vector<10x32xf32>
    %153 = arith.subf %136, %152 : vector<10x32xf32>
    %cst_41 = arith.constant 9.99999974E-6 : f32
    %154 = vector.broadcast %cst_41 : f32 to vector<10x1xf32>
    %155 = arith.addf %151, %154 : vector<10x1xf32>
    %156 = math.rsqrt %155 : vector<10x1xf32>
    %157 = vector.broadcast %156 : vector<10x1xf32> to vector<10x32xf32>
    %158 = arith.mulf %153, %157 : vector<10x32xf32>
    %159 = vector.broadcast %138 : vector<1x32xf32> to vector<10x32xf32>
    %160 = arith.mulf %158, %159 : vector<10x32xf32>
    %161 = vector.broadcast %140 : vector<1x32xf32> to vector<10x32xf32>
    %162 = arith.addf %160, %161 : vector<10x32xf32>
    %163 = arith.truncf %162 : vector<10x32xf32> to vector<10x32xbf16>
    %c0_42 = arith.constant 0 : index
    %c0_43 = arith.constant 0 : index
    %c0_44 = arith.constant 0 : index
    %164 = vector.load %arg15[%c0_42, %c0_43, %c0_44] : memref<1x32x128xbf16, #tpu.memory_space<vmem>>, vector<1x32x128xbf16>
    %165 = vector.shape_cast %164 : vector<1x32x128xbf16> to vector<32x128xbf16>
    %cst_45 = arith.constant dense<0.000000e+00> : vector<10x128xf32>
    %166 = tpu.matmul %163, %165, %cst_45 {dimension_numbers = #tpu.dot_dimension_numbers<[1], [0], [0], [1], [0, 0, 1, 1], [], []>} : vector<10x32xbf16>, vector<32x128xbf16>, vector<10x128xf32> -> vector<10x128xf32>
    %c0_46 = arith.constant 0 : index
    %c0_47 = arith.constant 0 : index
    %c0_48 = arith.constant 0 : index
    %167 = vector.load %arg16[%c0_46, %c0_47, %c0_48] : memref<1x1x128xf32, #tpu.memory_space<vmem>>, vector<1x1x128xf32>
    %168 = vector.shape_cast %167 : vector<1x1x128xf32> to vector<1x128xf32>
    %169 = vector.broadcast %168 : vector<1x128xf32> to vector<10x128xf32>
    %170 = arith.addf %166, %169 : vector<10x128xf32>
    %cst_49 = arith.constant 1.702000e+00 : f32
    %171 = vector.broadcast %cst_49 : f32 to vector<10x128xf32>
    %172 = arith.mulf %171, %170 : vector<10x128xf32>
    %173 = arith.negf %172 : vector<10x128xf32>
    %174 = math.exp %173 : vector<10x128xf32>
    %cst_50 = arith.constant 1.000000e+00 : f32
    %175 = vector.broadcast %cst_50 : f32 to vector<10x128xf32>
    %176 = arith.addf %175, %174 : vector<10x128xf32>
    %177 = arith.divf %175, %176 : vector<10x128xf32>
    %178 = arith.mulf %170, %177 : vector<10x128xf32>
    %179 = arith.truncf %178 : vector<10x128xf32> to vector<10x128xbf16>
    %c0_51 = arith.constant 0 : index
    %c0_52 = arith.constant 0 : index
    %c0_53 = arith.constant 0 : index
    %180 = vector.load %arg17[%c0_51, %c0_52, %c0_53] : memref<1x128x32xbf16, #tpu.memory_space<vmem>>, vector<1x128x32xbf16>
    %181 = vector.shape_cast %180 : vector<1x128x32xbf16> to vector<128x32xbf16>
    %cst_54 = arith.constant dense<0.000000e+00> : vector<10x32xf32>
    %182 = tpu.matmul %179, %181, %cst_54 {dimension_numbers = #tpu.dot_dimension_numbers<[1], [0], [0], [1], [0, 0, 1, 1], [], []>} : vector<10x128xbf16>, vector<128x32xbf16>, vector<10x32xf32> -> vector<10x32xf32>
    %c0_55 = arith.constant 0 : index
    %c0_56 = arith.constant 0 : index
    %c0_57 = arith.constant 0 : index
    %183 = vector.load %arg18[%c0_55, %c0_56, %c0_57] : memref<1x1x32xf32, #tpu.memory_space<vmem>>, vector<1x1x32xf32>
    %184 = vector.shape_cast %183 : vector<1x1x32xf32> to vector<1x32xf32>
    %185 = vector.broadcast %184 : vector<1x32xf32> to vector<10x32xf32>
    %186 = arith.addf %182, %185 : vector<10x32xf32>
    %187 = arith.addf %136, %186 : vector<10x32xf32>
    %c0_58 = arith.constant 0 : index
    %c0_59 = arith.constant 0 : index
    %188 = vector.load %arg20[%c0_58, %c0_59] : memref<10x32xf32, #tpu.memory_space<vmem>>, vector<10x32xf32>
    tpu.vector_store %arg20[%c0_58, %c0_59], %187 {strides = array<i32>} : memref<10x32xf32, #tpu.memory_space<vmem>>, vector<10x32xf32>,
    %c1_i32 = arith.constant 1 : i32
    %189 = arith.cmpi eq, %arg1, %c1_i32 : i32
    %190 = arith.extui %189 : i1 to i32
    %c0_i32_60 = arith.constant 0 : i32
    %191 = arith.cmpi ne, %190, %c0_i32_60 : i32
    scf.if %191 {
      %c0_61 = arith.constant 0 : index
      %c0_62 = arith.constant 0 : index
      %192 = vector.load %arg19[%c0_61, %c0_62] : memref<10x32xf32, #tpu.memory_space<vmem>>, vector<10x32xf32>
      tpu.vector_store %arg19[%c0_61, %c0_62], %187 {strides = array<i32>} : memref<10x32xf32, #tpu.memory_space<vmem>>, vector<10x32xf32>,
    } else {
    }
    return
  }
  func.func @transform_0(%arg0: i32, %arg1: i32) -> (i32, i32) {
    %c0_i32 = arith.constant 0 : i32
    %c0_i32_0 = arith.constant 0 : i32
    return %arg0, %c0_i32 : i32, i32
  }
  func.func @transform_1(%arg0: i32, %arg1: i32) -> (i32, i32) {
    %c0_i32 = arith.constant 0 : i32
    %c0_i32_0 = arith.constant 0 : i32
    %c0_i32_1 = arith.constant 0 : i32
    return %c0_i32, %c0_i32_0 : i32, i32
  }
  func.func @transform_2(%arg0: i32, %arg1: i32) -> (i32, i32) {
    %c0_i32 = arith.constant 0 : i32
    %c0_i32_0 = arith.constant 0 : i32
    %c0_i32_1 = arith.constant 0 : i32
    return %c0_i32, %c0_i32_0 : i32, i32
  }
  func.func @transform_3(%arg0: i32, %arg1: i32) -> (i32, i32) {
    %c0_i32 = arith.constant 0 : i32
    %c0_i32_0 = arith.constant 0 : i32
    %c0_i32_1 = arith.constant 0 : i32
    return %c0_i32, %c0_i32_0 : i32, i32
  }
  func.func @transform_4(%arg0: i32, %arg1: i32) -> (i32, i32) {
    %c0_i32 = arith.constant 0 : i32
    %c0_i32_0 = arith.constant 0 : i32
    %c0_i32_1 = arith.constant 0 : i32
    return %c0_i32, %c0_i32_0 : i32, i32
  }
  func.func @transform_5(%arg0: i32, %arg1: i32) -> (i32, i32, i32) {
    %c0_i32 = arith.constant 0 : i32
    %c0_i32_0 = arith.constant 0 : i32
    %c0_i32_1 = arith.constant 0 : i32
    return %arg1, %c0_i32, %c0_i32_0 : i32, i32, i32
  }
  func.func @transform_6(%arg0: i32, %arg1: i32) -> (i32, i32, i32) {
    %c0_i32 = arith.constant 0 : i32
    %c0_i32_0 = arith.constant 0 : i32
    %c0_i32_1 = arith.constant 0 : i32
    return %arg1, %c0_i32, %c0_i32_0 : i32, i32, i32
  }
  func.func @transform_7(%arg0: i32, %arg1: i32) -> (i32, i32, i32) {
    %c0_i32 = arith.constant 0 : i32
    %c0_i32_0 = arith.constant 0 : i32
    %c0_i32_1 = arith.constant 0 : i32
    return %arg1, %c0_i32, %c0_i32_0 : i32, i32, i32
  }
  func.func @transform_8(%arg0: i32, %arg1: i32) -> (i32, i32, i32) {
    %c0_i32 = arith.constant 0 : i32
    %c0_i32_0 = arith.constant 0 : i32
    %c0_i32_1 = arith.constant 0 : i32
    return %arg1, %c0_i32, %c0_i32_0 : i32, i32, i32
  }
  func.func @transform_9(%arg0: i32, %arg1: i32) -> (i32, i32, i32) {
    %c0_i32 = arith.constant 0 : i32
    %c0_i32_0 = arith.constant 0 : i32
    %c0_i32_1 = arith.constant 0 : i32
    return %arg1, %c0_i32, %c0_i32_0 : i32, i32, i32
  }
  func.func @transform_10(%arg0: i32, %arg1: i32) -> (i32, i32, i32) {
    %c0_i32 = arith.constant 0 : i32
    %c0_i32_0 = arith.constant 0 : i32
    %c0_i32_1 = arith.constant 0 : i32
    return %arg1, %c0_i32, %c0_i32_0 : i32, i32, i32
  }
  func.func @transform_11(%arg0: i32, %arg1: i32) -> (i32, i32, i32) {
    %c0_i32 = arith.constant 0 : i32
    %c0_i32_0 = arith.constant 0 : i32
    %c0_i32_1 = arith.constant 0 : i32
    return %arg1, %c0_i32, %c0_i32_0 : i32, i32, i32
  }
  func.func @transform_12(%arg0: i32, %arg1: i32) -> (i32, i32, i32) {
    %c0_i32 = arith.constant 0 : i32
    %c0_i32_0 = arith.constant 0 : i32
    %c0_i32_1 = arith.constant 0 : i32
    return %arg1, %c0_i32, %c0_i32_0 : i32, i32, i32
  }
  func.func @transform_13(%arg0: i32, %arg1: i32) -> (i32, i32, i32) {
    %c0_i32 = arith.constant 0 : i32
    %c0_i32_0 = arith.constant 0 : i32
    %c0_i32_1 = arith.constant 0 : i32
    return %arg1, %c0_i32, %c0_i32_0 : i32, i32, i32
  }
  func.func @transform_14(%arg0: i32, %arg1: i32) -> (i32, i32, i32) {
    %c0_i32 = arith.constant 0 : i32
    %c0_i32_0 = arith.constant 0 : i32
    %c0_i32_1 = arith.constant 0 : i32
    return %arg1, %c0_i32, %c0_i32_0 : i32, i32, i32
  }
  func.func @transform_15(%arg0: i32, %arg1: i32) -> (i32, i32, i32) {
    %c0_i32 = arith.constant 0 : i32
    %c0_i32_0 = arith.constant 0 : i32
    %c0_i32_1 = arith.constant 0 : i32
    return %arg1, %c0_i32, %c0_i32_0 : i32, i32, i32
  }
  func.func @transform_16(%arg0: i32, %arg1: i32) -> (i32, i32, i32) {
    %c0_i32 = arith.constant 0 : i32
    %c0_i32_0 = arith.constant 0 : i32
    %c0_i32_1 = arith.constant 0 : i32
    return %arg1, %c0_i32, %c0_i32_0 : i32, i32, i32
  }
  func.func @transform_17(%arg0: i32, %arg1: i32) -> (i32, i32) {
    %c0_i32 = arith.constant 0 : i32
    %c0_i32_0 = arith.constant 0 : i32
    return %arg0, %c0_i32 : i32, i32
  }
}

</mosaic_0001>

<llo_original>
// kernel: tpu_custom_call.1
$region0: #{tpu_custom_call.1}
  #allocation0 [shape = 'u32[]', space=smem, size = 0x4, offset = 0x4, fixed_abs, tag = 'smem constant byte address 0x4 - core index']
  #allocation1 [shape = 'u32[72,128]{1,0:T(1,128)}', space=vmem, size = 0x9000, scoped, tag = 'internal scratch']
  #allocation2 [shape = 'f32[10,32]{1,0:T(8,128)}', space=vmem, size = 0x2000, scoped, tag = 'scratch operand']
  %s0 = inlined_call_operand.vmem [shape: f32[10,192], index: 0, kind: input, shape index: {}]
  %s1 = inlined_call_operand.vmem [shape: bf16[192,32], index: 1, kind: input, shape index: {}]
  %s2 = inlined_call_operand.vmem [shape: f32[10,32], index: 2, kind: input, shape index: {}]
  %s3 = inlined_call_operand.vmem [shape: f32[1,32], index: 3, kind: input, shape index: {}]
  %s4 = inlined_call_operand.vmem [shape: f32[1,32], index: 4, kind: input, shape index: {}]
  %s5 = inlined_call_operand.vmem [shape: f32[2,1,32], index: 5, kind: input, shape index: {}]
  %s6 = inlined_call_operand.vmem [shape: f32[2,1,32], index: 6, kind: input, shape index: {}]
  %s7 = inlined_call_operand.vmem [shape: bf16[2,32,96], index: 7, kind: input, shape index: {}]
  %s8 = inlined_call_operand.vmem [shape: f32[2,1,96], index: 8, kind: input, shape index: {}]
  %s9 = inlined_call_operand.vmem [shape: bf16[2,32,32], index: 9, kind: input, shape index: {}]
  %s10 = inlined_call_operand.vmem [shape: f32[2,1,32], index: 10, kind: input, shape index: {}]
  %s11 = inlined_call_operand.vmem [shape: f32[2,1,32], index: 11, kind: input, shape index: {}]
  %s12 = inlined_call_operand.vmem [shape: f32[2,1,32], index: 12, kind: input, shape index: {}]
  %s13 = inlined_call_operand.vmem [shape: bf16[2,32,128], index: 13, kind: input, shape index: {}]
  %s14 = inlined_call_operand.vmem [shape: f32[2,1,128], index: 14, kind: input, shape index: {}]
  %s15 = inlined_call_operand.vmem [shape: bf16[2,128,32], index: 15, kind: input, shape index: {}]
  %s16 = inlined_call_operand.vmem [shape: f32[2,1,32], index: 16, kind: input, shape index: {}]
  %s17 = inlined_call_operand.hbm [shape: f32[10,32], index: 17, kind: output, shape index: {}]
  %s18 = sld [smem:[#allocation0]]
  $region109: #{tpu_custom_call.1} parent=0
    _
  %s20 = ssub.s32 1, %s18
  %s21 = scalar_select 0, %s20, %s18
  $region1: #{tpu_custom_call.1} parent=0
    #allocation3 [shape = 'u8[8192]{0}', space=vmem, size = 0x2000, scoped, tag = 'output window, operand 0, single buffered']
    #allocation4 [shape = 's32[2]{0}', space=sflag, size = 0x8, scoped, tag = 'scoped memory for tpu_custom_call.1']
    %22 = vsyncpa [#allocation4], 0
    loop: start=0, step=1, limit=4
    $region2: #{tpu_custom_call.1} parent=1 // loop_pre_header
      _
    $region3: #{tpu_custom_call.1} parent=1 // loop_header
      %s24 = sphi 0, %s28
      %p25 = scmp.ge.s32.totalorder %s24, 4
      %s31 = sphi 0, %s43
      %s32 = sphi 0, %s39
      %s33 = sphi 0, %s31
      %s34 = sphi 0, %s32
      %s35 = sphi 0, %s33
      %s36 = sphi 0, %s34
      %s46 = sphi 0, %s48
      %s49 = sphi 0, %s46
      %s50 = sphi 0, %s49
      %s66 = sphi 0, %s50
      %s70 = sphi 0, %s70
      %s72 = sphi 0, %s70
      %s73 = sphi 0, %s72
      %s87 = sphi 0, %s73
      %s91 = sphi 0, %s91
      %s93 = sphi 0, %s91
      %s94 = sphi 0, %s93
      %s108 = sphi 0, %s94
      %s112 = sphi 0, %s112
      %s114 = sphi 0, %s112
      %s115 = sphi 0, %s114
      %s129 = sphi 0, %s115
      %s133 = sphi 0, %s133
      %s135 = sphi 0, %s133
      %s136 = sphi 0, %s135
      %s150 = sphi 0, %s136
      %s156 = sphi 0, %s158
      %s159 = sphi 0, %s156
      %s160 = sphi 0, %s159
      %s176 = sphi 0, %s160
      %s182 = sphi 0, %s184
      %s185 = sphi 0, %s182
      %s186 = sphi 0, %s185
      %s202 = sphi 0, %s186
      %s208 = sphi 0, %s210
      %s211 = sphi 0, %s208
      %s212 = sphi 0, %s211
      %s228 = sphi 0, %s212
      %s234 = sphi 0, %s236
      %s237 = sphi 0, %s234
      %s238 = sphi 0, %s237
      %s254 = sphi 0, %s238
      %s260 = sphi 0, %s262
      %s263 = sphi 0, %s260
      %s264 = sphi 0, %s263
      %s280 = sphi 0, %s264
      %s286 = sphi 0, %s288
      %s289 = sphi 0, %s286
      %s290 = sphi 0, %s289
      %s306 = sphi 0, %s290
      %s312 = sphi 0, %s314
      %s315 = sphi 0, %s312
      %s316 = sphi 0, %s315
      %s332 = sphi 0, %s316
      %s338 = sphi 0, %s340
      %s341 = sphi 0, %s338
      %s342 = sphi 0, %s341
      %s358 = sphi 0, %s342
      %s364 = sphi 0, %s366
      %s367 = sphi 0, %s364
      %s368 = sphi 0, %s367
      %s384 = sphi 0, %s368
      %s390 = sphi 0, %s392
      %s393 = sphi 0, %s390
      %s394 = sphi 0, %s393
      %s410 = sphi 0, %s394
      %s416 = sphi 0, %s418
      %s419 = sphi 0, %s416
      %s420 = sphi 0, %s419
      %s436 = sphi 0, %s420
      %s442 = sphi 0, %s444
      %s445 = sphi 0, %s442
      %s446 = sphi 0, %s445
      %s462 = sphi 0, %s446
      %s468 = sphi 0, %s470
      %s471 = sphi 0, %s468
      %s472 = sphi 0, %s471
      %s488 = sphi 0, %s472
    $region4: #{tpu_custom_call.1} parent=1 // loop_header_branch
      %27 = sbr.rel (%p25) target = $region8
    $region5: #{tpu_custom_call.1} parent=1 // loop_body
      %s29 = ssub.s32 %s24, 1
      %s30 = ssub.s32 %s24, 2
      %s37 = sadd.s32 1, %s32
      %p38 = scmp.ge.s32.totalorder %s37, 2
      %s39 = scalar_select %p38, 0, %s37
      %s40 = sadd.s32 1, %s31
      %s41 = scalar_select %p38, %s40, %s31
      %p42 = scmp.ge.s32.totalorder %s41, 1
      %s43 = scalar_select %p42, 0, %s41
      %s44 = ssub.s32 %s31, %s43
      %p45 = scmp.eq.s32.totalorder %s44, 0
      %s47 = sadd.s32 %s46, 1
      %s48 = scalar_select %p45, %s46, %s47
      %p51 = pneg %p45
      %p52 = scmp.eq.s32.totalorder %s24, 1
      %p53 = por %p51, %p52
      %p54 = scmp.ne.s32.totalorder %s46, %s49
      %p55 = scmp.eq.s32.totalorder %s24, 0
      %p56 = por %p54, %p55
      %p57 = scmp.ne.s32.totalorder %s46, %s49
      %p58 = scmp.eq.s32.totalorder %s29, 1
      %p59 = por %p57, %p58
      %p60 = scmp.ne.s32.totalorder %s49, %s50
      %p61 = scmp.eq.s32.totalorder %s29, 0
      %p62 = por %p60, %p61
      %p63 = scmp.ne.s32.totalorder %s49, %s50
      %p64 = scmp.eq.s32.totalorder %s30, 1
      %p65 = por %p63, %p64
      %p67 = scmp.ne.s32.totalorder %s50, %s66
      %p68 = scmp.eq.s32.totalorder %s30, 0
      %p69 = por %p67, %p68
      %s71 = sadd.s32 %s70, 1
      %p74 = scmp.eq.s32.totalorder %s24, 1
      %p75 = scmp.ne.s32.totalorder %s70, %s72
      %p76 = scmp.eq.s32.totalorder %s24, 0
      %p77 = por %p75, %p76
      %p78 = scmp.ne.s32.totalorder %s70, %s72
      %p79 = scmp.eq.s32.totalorder %s29, 1
      %p80 = por %p78, %p79
      %p81 = scmp.ne.s32.totalorder %s72, %s73
      %p82 = scmp.eq.s32.totalorder %s29, 0
      %p83 = por %p81, %p82
      %p84 = scmp.ne.s32.totalorder %s72, %s73
      %p85 = scmp.eq.s32.totalorder %s30, 1
      %p86 = por %p84, %p85
      %p88 = scmp.ne.s32.totalorder %s73, %s87
      %p89 = scmp.eq.s32.totalorder %s30, 0
      %p90 = por %p88, %p89
      %s92 = sadd.s32 %s91, 1
      %p95 = scmp.eq.s32.totalorder %s24, 1
      %p96 = scmp.ne.s32.totalorder %s91, %s93
      %p97 = scmp.eq.s32.totalorder %s24, 0
      %p98 = por %p96, %p97
      %p99 = scmp.ne.s32.totalorder %s91, %s93
      %p100 = scmp.eq.s32.totalorder %s29, 1
      %p101 = por %p99, %p100
      %p102 = scmp.ne.s32.totalorder %s93, %s94
      %p103 = scmp.eq.s32.totalorder %s29, 0
      %p104 = por %p102, %p103
      %p105 = scmp.ne.s32.totalorder %s93, %s94
      %p106 = scmp.eq.s32.totalorder %s30, 1
      %p107 = por %p105, %p106
      %p109 = scmp.ne.s32.totalorder %s94, %s108
      %p110 = scmp.eq.s32.totalorder %s30, 0
      %p111 = por %p109, %p110
      %s113 = sadd.s32 %s112, 1
      %p116 = scmp.eq.s32.totalorder %s24, 1
      %p117 = scmp.ne.s32.totalorder %s112, %s114
      %p118 = scmp.eq.s32.totalorder %s24, 0
      %p119 = por %p117, %p118
      %p120 = scmp.ne.s32.totalorder %s112, %s114
      %p121 = scmp.eq.s32.totalorder %s29, 1
      %p122 = por %p120, %p121
      %p123 = scmp.ne.s32.totalorder %s114, %s115
      %p124 = scmp.eq.s32.totalorder %s29, 0
      %p125 = por %p123, %p124
      %p126 = scmp.ne.s32.totalorder %s114, %s115
      %p127 = scmp.eq.s32.totalorder %s30, 1
      %p128 = por %p126, %p127
      %p130 = scmp.ne.s32.totalorder %s115, %s129
      %p131 = scmp.eq.s32.totalorder %s30, 0
      %p132 = por %p130, %p131
      %s134 = sadd.s32 %s133, 1
      %p137 = scmp.eq.s32.totalorder %s24, 1
      %p138 = scmp.ne.s32.totalorder %s133, %s135
      %p139 = scmp.eq.s32.totalorder %s24, 0
      %p140 = por %p138, %p139
      %p141 = scmp.ne.s32.totalorder %s133, %s135
      %p142 = scmp.eq.s32.totalorder %s29, 1
      %p143 = por %p141, %p142
      %p144 = scmp.ne.s32.totalorder %s135, %s136
      %p145 = scmp.eq.s32.totalorder %s29, 0
      %p146 = por %p144, %p145
      %p147 = scmp.ne.s32.totalorder %s135, %s136
      %p148 = scmp.eq.s32.totalorder %s30, 1
      %p149 = por %p147, %p148
      %p151 = scmp.ne.s32.totalorder %s136, %s150
      %p152 = scmp.eq.s32.totalorder %s30, 0
      %p153 = por %p151, %p152
      %s154 = ssub.s32 %s32, %s39
      %p155 = scmp.eq.s32.totalorder %s154, 0
      %s157 = sadd.s32 %s156, 1
      %s158 = scalar_select %p155, %s156, %s157
      %p161 = pneg %p155
      %p162 = scmp.eq.s32.totalorder %s24, 1
      %p163 = por %p161, %p162
      %p164 = scmp.ne.s32.totalorder %s156, %s159
      %p165 = scmp.eq.s32.totalorder %s24, 0
      %p166 = por %p164, %p165
      %p167 = scmp.ne.s32.totalorder %s156, %s159
      %p168 = scmp.eq.s32.totalorder %s29, 1
      %p169 = por %p167, %p168
      %p170 = scmp.ne.s32.totalorder %s159, %s160
      %p171 = scmp.eq.s32.totalorder %s29, 0
      %p172 = por %p170, %p171
      %p173 = scmp.ne.s32.totalorder %s159, %s160
      %p174 = scmp.eq.s32.totalorder %s30, 1
      %p175 = por %p173, %p174
      %p177 = scmp.ne.s32.totalorder %s160, %s176
      %p178 = scmp.eq.s32.totalorder %s30, 0
      %p179 = por %p177, %p178
      %s180 = ssub.s32 %s32, %s39
      %p181 = scmp.eq.s32.totalorder %s180, 0
      %s183 = sadd.s32 %s182, 1
      %s184 = scalar_select %p181, %s182, %s183
      %p187 = pneg %p181
      %p188 = scmp.eq.s32.totalorder %s24, 1
      %p189 = por %p187, %p188
      %p190 = scmp.ne.s32.totalorder %s182, %s185
      %p191 = scmp.eq.s32.totalorder %s24, 0
      %p192 = por %p190, %p191
      %p193 = scmp.ne.s32.totalorder %s182, %s185
      %p194 = scmp.eq.s32.totalorder %s29, 1
      %p195 = por %p193, %p194
      %p196 = scmp.ne.s32.totalorder %s185, %s186
      %p197 = scmp.eq.s32.totalorder %s29, 0
      %p198 = por %p196, %p197
      %p199 = scmp.ne.s32.totalorder %s185, %s186
      %p200 = scmp.eq.s32.totalorder %s30, 1
      %p201 = por %p199, %p200
      %p203 = scmp.ne.s32.totalorder %s186, %s202
      %p204 = scmp.eq.s32.totalorder %s30, 0
      %p205 = por %p203, %p204
      %s206 = ssub.s32 %s32, %s39
      %p207 = scmp.eq.s32.totalorder %s206, 0
      %s209 = sadd.s32 %s208, 1
      %s210 = scalar_select %p207, %s208, %s209
      %p213 = pneg %p207
      %p214 = scmp.eq.s32.totalorder %s24, 1
      %p215 = por %p213, %p214
      %p216 = scmp.ne.s32.totalorder %s208, %s211
      %p217 = scmp.eq.s32.totalorder %s24, 0
      %p218 = por %p216, %p217
      %p219 = scmp.ne.s32.totalorder %s208, %s211
      %p220 = scmp.eq.s32.totalorder %s29, 1
      %p221 = por %p219, %p220
      %p222 = scmp.ne.s32.totalorder %s211, %s212
      %p223 = scmp.eq.s32.totalorder %s29, 0
      %p224 = por %p222, %p223
      %p225 = scmp.ne.s32.totalorder %s211, %s212
      %p226 = scmp.eq.s32.totalorder %s30, 1
      %p227 = por %p225, %p226
      %p229 = scmp.ne.s32.totalorder %s212, %s228
      %p230 = scmp.eq.s32.totalorder %s30, 0
      %p231 = por %p229, %p230
      %s232 = ssub.s32 %s32, %s39
      %p233 = scmp.eq.s32.totalorder %s232, 0
      %s235 = sadd.s32 %s234, 1
      %s236 = scalar_select %p233, %s234, %s235
      %p239 = pneg %p233
      %p240 = scmp.eq.s32.totalorder %s24, 1
      %p241 = por %p239, %p240
      %p242 = scmp.ne.s32.totalorder %s234, %s237
      %p243 = scmp.eq.s32.totalorder %s24, 0
      %p244 = por %p242, %p243
      %p245 = scmp.ne.s32.totalorder %s234, %s237
      %p246 = scmp.eq.s32.totalorder %s29, 1
      %p247 = por %p245, %p246
      %p248 = scmp.ne.s32.totalorder %s237, %s238
      %p249 = scmp.eq.s32.totalorder %s29, 0
      %p250 = por %p248, %p249
      %p251 = scmp.ne.s32.totalorder %s237, %s238
      %p252 = scmp.eq.s32.totalorder %s30, 1
      %p253 = por %p251, %p252
      %p255 = scmp.ne.s32.totalorder %s238, %s254
      %p256 = scmp.eq.s32.totalorder %s30, 0
      %p257 = por %p255, %p256
      %s258 = ssub.s32 %s32, %s39
      %p259 = scmp.eq.s32.totalorder %s258, 0
      %s261 = sadd.s32 %s260, 1
      %s262 = scalar_select %p259, %s260, %s261
      %p265 = pneg %p259
      %p266 = scmp.eq.s32.totalorder %s24, 1
      %p267 = por %p265, %p266
      %p268 = scmp.ne.s32.totalorder %s260, %s263
      %p269 = scmp.eq.s32.totalorder %s24, 0
      %p270 = por %p268, %p269
      %p271 = scmp.ne.s32.totalorder %s260, %s263
      %p272 = scmp.eq.s32.totalorder %s29, 1
      %p273 = por %p271, %p272
      %p274 = scmp.ne.s32.totalorder %s263, %s264
      %p275 = scmp.eq.s32.totalorder %s29, 0
      %p276 = por %p274, %p275
      %p277 = scmp.ne.s32.totalorder %s263, %s264
      %p278 = scmp.eq.s32.totalorder %s30, 1
      %p279 = por %p277, %p278
      %p281 = scmp.ne.s32.totalorder %s264, %s280
      %p282 = scmp.eq.s32.totalorder %s30, 0
      %p283 = por %p281, %p282
      %s284 = ssub.s32 %s32, %s39
      %p285 = scmp.eq.s32.totalorder %s284, 0
      %s287 = sadd.s32 %s286, 1
      %s288 = scalar_select %p285, %s286, %s287
      %p291 = pneg %p285
      %p292 = scmp.eq.s32.totalorder %s24, 1
      %p293 = por %p291, %p292
      %p294 = scmp.ne.s32.totalorder %s286, %s289
      %p295 = scmp.eq.s32.totalorder %s24, 0
      %p296 = por %p294, %p295
      %p297 = scmp.ne.s32.totalorder %s286, %s289
      %p298 = scmp.eq.s32.totalorder %s29, 1
      %p299 = por %p297, %p298
      %p300 = scmp.ne.s32.totalorder %s289, %s290
      %p301 = scmp.eq.s32.totalorder %s29, 0
      %p302 = por %p300, %p301
      %p303 = scmp.ne.s32.totalorder %s289, %s290
      %p304 = scmp.eq.s32.totalorder %s30, 1
      %p305 = por %p303, %p304
      %p307 = scmp.ne.s32.totalorder %s290, %s306
      %p308 = scmp.eq.s32.totalorder %s30, 0
      %p309 = por %p307, %p308
      %s310 = ssub.s32 %s32, %s39
      %p311 = scmp.eq.s32.totalorder %s310, 0
      %s313 = sadd.s32 %s312, 1
      %s314 = scalar_select %p311, %s312, %s313
      %p317 = pneg %p311
      %p318 = scmp.eq.s32.totalorder %s24, 1
      %p319 = por %p317, %p318
      %p320 = scmp.ne.s32.totalorder %s312, %s315
      %p321 = scmp.eq.s32.totalorder %s24, 0
      %p322 = por %p320, %p321
      %p323 = scmp.ne.s32.totalorder %s312, %s315
      %p324 = scmp.eq.s32.totalorder %s29, 1
      %p325 = por %p323, %p324
      %p326 = scmp.ne.s32.totalorder %s315, %s316
      %p327 = scmp.eq.s32.totalorder %s29, 0
      %p328 = por %p326, %p327
      %p329 = scmp.ne.s32.totalorder %s315, %s316
      %p330 = scmp.eq.s32.totalorder %s30, 1
      %p331 = por %p329, %p330
      %p333 = scmp.ne.s32.totalorder %s316, %s332
      %p334 = scmp.eq.s32.totalorder %s30, 0
      %p335 = por %p333, %p334
      %s336 = ssub.s32 %s32, %s39
      %p337 = scmp.eq.s32.totalorder %s336, 0
      %s339 = sadd.s32 %s338, 1
      %s340 = scalar_select %p337, %s338, %s339
      %p343 = pneg %p337
      %p344 = scmp.eq.s32.totalorder %s24, 1
      %p345 = por %p343, %p344
      %p346 = scmp.ne.s32.totalorder %s338, %s341
      %p347 = scmp.eq.s32.totalorder %s24, 0
      %p348 = por %p346, %p347
      %p349 = scmp.ne.s32.totalorder %s338, %s341
      %p350 = scmp.eq.s32.totalorder %s29, 1
      %p351 = por %p349, %p350
      %p352 = scmp.ne.s32.totalorder %s341, %s342
      %p353 = scmp.eq.s32.totalorder %s29, 0
      %p354 = por %p352, %p353
      %p355 = scmp.ne.s32.totalorder %s341, %s342
      %p356 = scmp.eq.s32.totalorder %s30, 1
      %p357 = por %p355, %p356
      %p359 = scmp.ne.s32.totalorder %s342, %s358
      %p360 = scmp.eq.s32.totalorder %s30, 0
      %p361 = por %p359, %p360
      %s362 = ssub.s32 %s32, %s39
      %p363 = scmp.eq.s32.totalorder %s362, 0
      %s365 = sadd.s32 %s364, 1
      %s366 = scalar_select %p363, %s364, %s365
      %p369 = pneg %p363
      %p370 = scmp.eq.s32.totalorder %s24, 1
      %p371 = por %p369, %p370
      %p372 = scmp.ne.s32.totalorder %s364, %s367
      %p373 = scmp.eq.s32.totalorder %s24, 0
      %p374 = por %p372, %p373
      %p375 = scmp.ne.s32.totalorder %s364, %s367
      %p376 = scmp.eq.s32.totalorder %s29, 1
      %p377 = por %p375, %p376
      %p378 = scmp.ne.s32.totalorder %s367, %s368
      %p379 = scmp.eq.s32.totalorder %s29, 0
      %p380 = por %p378, %p379
      %p381 = scmp.ne.s32.totalorder %s367, %s368
      %p382 = scmp.eq.s32.totalorder %s30, 1
      %p383 = por %p381, %p382
      %p385 = scmp.ne.s32.totalorder %s368, %s384
      %p386 = scmp.eq.s32.totalorder %s30, 0
      %p387 = por %p385, %p386
      %s388 = ssub.s32 %s32, %s39
      %p389 = scmp.eq.s32.totalorder %s388, 0
      %s391 = sadd.s32 %s390, 1
      %s392 = scalar_select %p389, %s390, %s391
      %p395 = pneg %p389
      %p396 = scmp.eq.s32.totalorder %s24, 1
      %p397 = por %p395, %p396
      %p398 = scmp.ne.s32.totalorder %s390, %s393
      %p399 = scmp.eq.s32.totalorder %s24, 0
      %p400 = por %p398, %p399
      %p401 = scmp.ne.s32.totalorder %s390, %s393
      %p402 = scmp.eq.s32.totalorder %s29, 1
      %p403 = por %p401, %p402
      %p404 = scmp.ne.s32.totalorder %s393, %s394
      %p405 = scmp.eq.s32.totalorder %s29, 0
      %p406 = por %p404, %p405
      %p407 = scmp.ne.s32.totalorder %s393, %s394
      %p408 = scmp.eq.s32.totalorder %s30, 1
      %p409 = por %p407, %p408
      %p411 = scmp.ne.s32.totalorder %s394, %s410
      %p412 = scmp.eq.s32.totalorder %s30, 0
      %p413 = por %p411, %p412
      %s414 = ssub.s32 %s32, %s39
      %p415 = scmp.eq.s32.totalorder %s414, 0
      %s417 = sadd.s32 %s416, 1
      %s418 = scalar_select %p415, %s416, %s417
      %p421 = pneg %p415
      %p422 = scmp.eq.s32.totalorder %s24, 1
      %p423 = por %p421, %p422
      %p424 = scmp.ne.s32.totalorder %s416, %s419
      %p425 = scmp.eq.s32.totalorder %s24, 0
      %p426 = por %p424, %p425
      %p427 = scmp.ne.s32.totalorder %s416, %s419
      %p428 = scmp.eq.s32.totalorder %s29, 1
      %p429 = por %p427, %p428
      %p430 = scmp.ne.s32.totalorder %s419, %s420
      %p431 = scmp.eq.s32.totalorder %s29, 0
      %p432 = por %p430, %p431
      %p433 = scmp.ne.s32.totalorder %s419, %s420
      %p434 = scmp.eq.s32.totalorder %s30, 1
      %p435 = por %p433, %p434
      %p437 = scmp.ne.s32.totalorder %s420, %s436
      %p438 = scmp.eq.s32.totalorder %s30, 0
      %p439 = por %p437, %p438
      %s440 = ssub.s32 %s32, %s39
      %p441 = scmp.eq.s32.totalorder %s440, 0
      %s443 = sadd.s32 %s442, 1
      %s444 = scalar_select %p441, %s442, %s443
      %p447 = pneg %p441
      %p448 = scmp.eq.s32.totalorder %s24, 1
      %p449 = por %p447, %p448
      %p450 = scmp.ne.s32.totalorder %s442, %s445
      %p451 = scmp.eq.s32.totalorder %s24, 0
      %p452 = por %p450, %p451
      %p453 = scmp.ne.s32.totalorder %s442, %s445
      %p454 = scmp.eq.s32.totalorder %s29, 1
      %p455 = por %p453, %p454
      %p456 = scmp.ne.s32.totalorder %s445, %s446
      %p457 = scmp.eq.s32.totalorder %s29, 0
      %p458 = por %p456, %p457
      %p459 = scmp.ne.s32.totalorder %s445, %s446
      %p460 = scmp.eq.s32.totalorder %s30, 1
      %p461 = por %p459, %p460
      %p463 = scmp.ne.s32.totalorder %s446, %s462
      %p464 = scmp.eq.s32.totalorder %s30, 0
      %p465 = por %p463, %p464
      %s466 = ssub.s32 %s31, %s43
      %p467 = scmp.eq.s32.totalorder %s466, 0
      %s469 = sadd.s32 %s468, 1
      %s470 = scalar_select %p467, %s468, %s469
      %p473 = pneg %p467
      %p474 = scmp.eq.s32.totalorder %s24, 1
      %p475 = por %p473, %p474
      %p476 = scmp.ne.s32.totalorder %s468, %s471
      %p477 = scmp.eq.s32.totalorder %s24, 0
      %p478 = por %p476, %p477
      %p479 = scmp.ne.s32.totalorder %s468, %s471
      %p480 = scmp.eq.s32.totalorder %s29, 1
      %p481 = por %p479, %p480
      %p482 = scmp.ne.s32.totalorder %s471, %s472
      %p483 = scmp.eq.s32.totalorder %s29, 0
      %p484 = por %p482, %p483
      %p485 = scmp.ne.s32.totalorder %s471, %s472
      %p486 = scmp.eq.s32.totalorder %s30, 1
      %p487 = por %p485, %p486
      %p489 = scmp.ne.s32.totalorder %s472, %s488
      %p490 = scmp.eq.s32.totalorder %s30, 0
      %p491 = por %p489, %p490
      %p492 = scmp.le.s32.totalorder 1, %s24
      %p493 = scmp.lt.s32.totalorder %s24, 3
      %p494 = pnand %p492, %p493
      %p495 = pneg %p494
      // Predicated region
      $region9: #{tpu_custom_call.1} parent=5 // pred_check
        _
      $region10: #{tpu_custom_call.1} parent=5 // pred_check_branch
        %497 = sbr.rel (%p494) target = $region12
      $region11: #{tpu_custom_call.1} parent=5 // pred_region
        %s498 = ssub.s32 %s24, 1
        // Predicated region
        $region13: #{tpu_custom_call.1} parent=11 // pred_check
          %p499 = pneg %p62
        $region14: #{tpu_custom_call.1} parent=11 // pred_check_branch
          %501 = sbr.rel (%p499) target = $region16
        $region15: #{tpu_custom_call.1} parent=11 // pred_region
          %s502 = smul.u32 2, %s33
          %p503 = scmp.lt.s32.totalorder %s502, 1
          %s504 = scalar_select %p503, %s502, 1
          %s505 = smul.addr %s504, 2
          %s506 = smul.addr %s505, 8
          %s507 = scalar_lea.vmem %s0, %s506
          %s508 = smul.u32 2, %s33
        $region16: #{tpu_custom_call.1} parent=11 // pred_fallthru
          _
        // Predicated region
        $region17: #{tpu_custom_call.1} parent=11 // pred_check
          %p509 = pneg %p83
        $region18: #{tpu_custom_call.1} parent=11 // pred_check_branch
          %511 = sbr.rel (%p509) target = $region20
        $region19: #{tpu_custom_call.1} parent=11 // pred_region
          _
        $region20: #{tpu_custom_call.1} parent=11 // pred_fallthru
          _
        // Predicated region
        $region21: #{tpu_custom_call.1} parent=11 // pred_check
          %p512 = pneg %p104
        $region22: #{tpu_custom_call.1} parent=11 // pred_check_branch
          %514 = sbr.rel (%p512) target = $region24
        $region23: #{tpu_custom_call.1} parent=11 // pred_region
          _
        $region24: #{tpu_custom_call.1} parent=11 // pred_fallthru
          _
        // Predicated region
        $region25: #{tpu_custom_call.1} parent=11 // pred_check
          %p515 = pneg %p125
        $region26: #{tpu_custom_call.1} parent=11 // pred_check_branch
          %517 = sbr.rel (%p515) target = $region28
        $region27: #{tpu_custom_call.1} parent=11 // pred_region
          _
        $region28: #{tpu_custom_call.1} parent=11 // pred_fallthru
          _
        // Predicated region
        $region29: #{tpu_custom_call.1} parent=11 // pred_check
          %p518 = pneg %p146
        $region30: #{tpu_custom_call.1} parent=11 // pred_check_branch
          %520 = sbr.rel (%p518) target = $region32
        $region31: #{tpu_custom_call.1} parent=11 // pred_region
          _
        $region32: #{tpu_custom_call.1} parent=11 // pred_fallthru
          _
      $region12: #{tpu_custom_call.1} parent=5 // pred_fallthru
        _
      %p521 = scmp.lt.s32.totalorder %s24, 2
      // Predicated region
      $region33: #{tpu_custom_call.1} parent=5 // pred_check
        %p522 = pneg %p521
      $region34: #{tpu_custom_call.1} parent=5 // pred_check_branch
        %524 = sbr.rel (%p522) target = $region36
      $region35: #{tpu_custom_call.1} parent=5 // pred_region
        // Predicated region
        $region37: #{tpu_custom_call.1} parent=35 // pred_check
          %p525 = pneg %p166
        $region38: #{tpu_custom_call.1} parent=35 // pred_check_branch
          %527 = sbr.rel (%p525) target = $region40
        $region39: #{tpu_custom_call.1} parent=35 // pred_region
          %p528 = scmp.lt.s32.totalorder %s32, 1
          %s529 = scalar_select %p528, %s32, 1
          %s530 = scalar_lea.vmem %s5, %s529
        $region40: #{tpu_custom_call.1} parent=35 // pred_fallthru
          _
        // Predicated region
        $region41: #{tpu_custom_call.1} parent=35 // pred_check
          %p531 = pneg %p192
        $region42: #{tpu_custom_call.1} parent=35 // pred_check_branch
          %533 = sbr.rel (%p531) target = $region44
        $region43: #{tpu_custom_call.1} parent=35 // pred_region
          %p534 = scmp.lt.s32.totalorder %s32, 1
          %s535 = scalar_select %p534, %s32, 1
          %s536 = scalar_lea.vmem %s6, %s535
        $region44: #{tpu_custom_call.1} parent=35 // pred_fallthru
          _
        // Predicated region
        $region45: #{tpu_custom_call.1} parent=35 // pred_check
          %p537 = pneg %p218
        $region46: #{tpu_custom_call.1} parent=35 // pred_check_branch
          %539 = sbr.rel (%p537) target = $region48
        $region47: #{tpu_custom_call.1} parent=35 // pred_region
          %p540 = scmp.lt.s32.totalorder %s32, 1
          %s541 = scalar_select %p540, %s32, 1
          %s542 = smul.addr %s541, 4
          %s543 = smul.addr %s542, 4
          %s544 = scalar_lea.vmem %s7, %s543
        $region48: #{tpu_custom_call.1} parent=35 // pred_fallthru
          _
        // Predicated region
        $region49: #{tpu_custom_call.1} parent=35 // pred_check
          %p545 = pneg %p244
        $region50: #{tpu_custom_call.1} parent=35 // pred_check_branch
          %547 = sbr.rel (%p545) target = $region52
        $region51: #{tpu_custom_call.1} parent=35 // pred_region
          %p548 = scmp.lt.s32.totalorder %s32, 1
          %s549 = scalar_select %p548, %s32, 1
          %s550 = scalar_lea.vmem %s8, %s549
        $region52: #{tpu_custom_call.1} parent=35 // pred_fallthru
          _
        // Predicated region
        $region53: #{tpu_custom_call.1} parent=35 // pred_check
          %p551 = pneg %p270
        $region54: #{tpu_custom_call.1} parent=35 // pred_check_branch
          %553 = sbr.rel (%p551) target = $region56
        $region55: #{tpu_custom_call.1} parent=35 // pred_region
          %p554 = scmp.lt.s32.totalorder %s32, 1
          %s555 = scalar_select %p554, %s32, 1
          %s556 = smul.addr %s555, 4
          %s557 = smul.addr %s556, 4
          %s558 = scalar_lea.vmem %s9, %s557
        $region56: #{tpu_custom_call.1} parent=35 // pred_fallthru
          _
        // Predicated region
        $region57: #{tpu_custom_call.1} parent=35 // pred_check
          %p559 = pneg %p296
        $region58: #{tpu_custom_call.1} parent=35 // pred_check_branch
          %561 = sbr.rel (%p559) target = $region60
        $region59: #{tpu_custom_call.1} parent=35 // pred_region
          %p562 = scmp.lt.s32.totalorder %s32, 1
          %s563 = scalar_select %p562, %s32, 1
          %s564 = scalar_lea.vmem %s10, %s563
        $region60: #{tpu_custom_call.1} parent=35 // pred_fallthru
          _
        // Predicated region
        $region61: #{tpu_custom_call.1} parent=35 // pred_check
          %p565 = pneg %p322
        $region62: #{tpu_custom_call.1} parent=35 // pred_check_branch
          %567 = sbr.rel (%p565) target = $region64
        $region63: #{tpu_custom_call.1} parent=35 // pred_region
          %p568 = scmp.lt.s32.totalorder %s32, 1
          %s569 = scalar_select %p568, %s32, 1
          %s570 = scalar_lea.vmem %s11, %s569
        $region64: #{tpu_custom_call.1} parent=35 // pred_fallthru
          _
        // Predicated region
        $region65: #{tpu_custom_call.1} parent=35 // pred_check
          %p571 = pneg %p348
        $region66: #{tpu_custom_call.1} parent=35 // pred_check_branch
          %573 = sbr.rel (%p571) target = $region68
        $region67: #{tpu_custom_call.1} parent=35 // pred_region
          %p574 = scmp.lt.s32.totalorder %s32, 1
          %s575 = scalar_select %p574, %s32, 1
          %s576 = scalar_lea.vmem %s12, %s575
        $region68: #{tpu_custom_call.1} parent=35 // pred_fallthru
          _
        // Predicated region
        $region69: #{tpu_custom_call.1} parent=35 // pred_check
          %p577 = pneg %p374
        $region70: #{tpu_custom_call.1} parent=35 // pred_check_branch
          %579 = sbr.rel (%p577) target = $region72
        $region71: #{tpu_custom_call.1} parent=35 // pred_region
          %p580 = scmp.lt.s32.totalorder %s32, 1
          %s581 = scalar_select %p580, %s32, 1
          %s582 = smul.addr %s581, 4
          %s583 = smul.addr %s582, 4
          %s584 = scalar_lea.vmem %s13, %s583
        $region72: #{tpu_custom_call.1} parent=35 // pred_fallthru
          _
        // Predicated region
        $region73: #{tpu_custom_call.1} parent=35 // pred_check
          %p585 = pneg %p400
        $region74: #{tpu_custom_call.1} parent=35 // pred_check_branch
          %587 = sbr.rel (%p585) target = $region76
        $region75: #{tpu_custom_call.1} parent=35 // pred_region
          %p588 = scmp.lt.s32.totalorder %s32, 1
          %s589 = scalar_select %p588, %s32, 1
          %s590 = scalar_lea.vmem %s14, %s589
        $region76: #{tpu_custom_call.1} parent=35 // pred_fallthru
          _
        // Predicated region
        $region77: #{tpu_custom_call.1} parent=35 // pred_check
          %p591 = pneg %p426
        $region78: #{tpu_custom_call.1} parent=35 // pred_check_branch
          %593 = sbr.rel (%p591) target = $region80
        $region79: #{tpu_custom_call.1} parent=35 // pred_region
          %p594 = scmp.lt.s32.totalorder %s32, 1
          %s595 = scalar_select %p594, %s32, 1
          %s596 = smul.addr %s595, 16
          %s597 = smul.addr %s596, 4
          %s598 = scalar_lea.vmem %s15, %s597
        $region80: #{tpu_custom_call.1} parent=35 // pred_fallthru
          _
        // Predicated region
        $region81: #{tpu_custom_call.1} parent=35 // pred_check
          %p599 = pneg %p452
        $region82: #{tpu_custom_call.1} parent=35 // pred_check_branch
          %601 = sbr.rel (%p599) target = $region84
        $region83: #{tpu_custom_call.1} parent=35 // pred_region
          %p602 = scmp.lt.s32.totalorder %s32, 1
          %s603 = scalar_select %p602, %s32, 1
          %s604 = scalar_lea.vmem %s16, %s603
        $region84: #{tpu_custom_call.1} parent=35 // pred_fallthru
          _
      $region36: #{tpu_custom_call.1} parent=5 // pred_fallthru
        _
      %p605 = scmp.le.s32.totalorder 1, %s24
      %p606 = scmp.lt.s32.totalorder %s24, 3
      %p607 = pnand %p605, %p606
      %p608 = pneg %p607
      // Predicated region
      $region85: #{tpu_custom_call.1} parent=5 // pred_check
        _
      $region86: #{tpu_custom_call.1} parent=5 // pred_check_branch
        %610 = sbr.rel (%p607) target = $region88
      $region87: #{tpu_custom_call.1} parent=5 // pred_region
        %s611 = ssub.s32 %s24, 1
        %s612 = smul.u32 2, %s33
        %p613 = scmp.lt.s32.totalorder %s612, 1
        %s614 = scalar_select %p613, %s612, 1
        %s615 = smul.addr %s614, 2
        %s616 = smul.addr %s615, 8
        %s617 = scalar_lea.vmem %s0, %s616
        %p618 = pneg %p62
        %p619 = pneg %p59
        %p620 = pneg %p83
        %p621 = pneg %p80
        %p622 = pneg %p104
        %p623 = pneg %p101
        %p624 = pneg %p125
        %p625 = pneg %p122
        %p626 = pneg %p146
        %p627 = pneg %p143
        %p628 = scmp.lt.s32.totalorder %s34, 1
        %s629 = scalar_select %p628, %s34, 1
        %s630 = scalar_lea.vmem %s5, %s629
        %p631 = pneg %p172
        %p632 = pneg %p169
        %p633 = scmp.lt.s32.totalorder %s34, 1
        %s634 = scalar_select %p633, %s34, 1
        %s635 = scalar_lea.vmem %s6, %s634
        %p636 = pneg %p198
        %p637 = pneg %p195
        %p638 = scmp.lt.s32.totalorder %s34, 1
        %s639 = scalar_select %p638, %s34, 1
        %s640 = smul.addr %s639, 4
        %s641 = smul.addr %s640, 4
        %s642 = scalar_lea.vmem %s7, %s641
        %p643 = pneg %p224
        %p644 = pneg %p221
        %p645 = scmp.lt.s32.totalorder %s34, 1
        %s646 = scalar_select %p645, %s34, 1
        %s647 = scalar_lea.vmem %s8, %s646
        %p648 = pneg %p250
        %p649 = pneg %p247
        %p650 = scmp.lt.s32.totalorder %s34, 1
        %s651 = scalar_select %p650, %s34, 1
        %s652 = smul.addr %s651, 4
        %s653 = smul.addr %s652, 4
        %s654 = scalar_lea.vmem %s9, %s653
        %p655 = pneg %p276
        %p656 = pneg %p273
        %p657 = scmp.lt.s32.totalorder %s34, 1
        %s658 = scalar_select %p657, %s34, 1
        %s659 = scalar_lea.vmem %s10, %s658
        %p660 = pneg %p302
        %p661 = pneg %p299
        %p662 = scmp.lt.s32.totalorder %s34, 1
        %s663 = scalar_select %p662, %s34, 1
        %s664 = scalar_lea.vmem %s11, %s663
        %p665 = pneg %p328
        %p666 = pneg %p325
        %p667 = scmp.lt.s32.totalorder %s34, 1
        %s668 = scalar_select %p667, %s34, 1
        %s669 = scalar_lea.vmem %s12, %s668
        %p670 = pneg %p354
        %p671 = pneg %p351
        %p672 = scmp.lt.s32.totalorder %s34, 1
        %s673 = scalar_select %p672, %s34, 1
        %s674 = smul.addr %s673, 4
        %s675 = smul.addr %s674, 4
        %s676 = scalar_lea.vmem %s13, %s675
        %p677 = pneg %p380
        %p678 = pneg %p377
        %p679 = scmp.lt.s32.totalorder %s34, 1
        %s680 = scalar_select %p679, %s34, 1
        %s681 = scalar_lea.vmem %s14, %s680
        %p682 = pneg %p406
        %p683 = pneg %p403
        %p684 = scmp.lt.s32.totalorder %s34, 1
        %s685 = scalar_select %p684, %s34, 1
        %s686 = smul.addr %s685, 16
        %s687 = smul.addr %s686, 4
        %s688 = scalar_lea.vmem %s15, %s687
        %p689 = pneg %p432
        %p690 = pneg %p429
        %p691 = scmp.lt.s32.totalorder %s34, 1
        %s692 = scalar_select %p691, %s34, 1
        %s693 = scalar_lea.vmem %s16, %s692
        %p694 = pneg %p458
        %p695 = pneg %p455
        %p696 = pneg %p484
        %p697 = pneg %p481
        %s698 = smul.u32 2, %s33
        %p699 = scmp.lt.s32.totalorder %s698, 1
        %s700 = scalar_select %p699, %s698, 1
        %s701 = smul.addr %s700, 2
        %s702 = smul.addr %s701, 8
        %s703 = scalar_lea.vmem %s0, %s702
        %s704 = smul.u32 2, %s33
        %p705 = scmp.lt.s32.totalorder %s34, 1
        %s706 = scalar_select %p705, %s34, 1
        %s707 = scalar_lea.vmem %s5, %s706
        %p708 = scmp.lt.s32.totalorder %s34, 1
        %s709 = scalar_select %p708, %s34, 1
        %s710 = scalar_lea.vmem %s6, %s709
        %p711 = scmp.lt.s32.totalorder %s34, 1
        %s712 = scalar_select %p711, %s34, 1
        %s713 = smul.addr %s712, 4
        %s714 = smul.addr %s713, 4
        %s715 = scalar_lea.vmem %s7, %s714
        %p716 = scmp.lt.s32.totalorder %s34, 1
        %s717 = scalar_select %p716, %s34, 1
        %s718 = scalar_lea.vmem %s8, %s717
        %p719 = scmp.lt.s32.totalorder %s34, 1
        %s720 = scalar_select %p719, %s34, 1
        %s721 = smul.addr %s720, 4
        %s722 = smul.addr %s721, 4
        %s723 = scalar_lea.vmem %s9, %s722
        %p724 = scmp.lt.s32.totalorder %s34, 1
        %s725 = scalar_select %p724, %s34, 1
        %s726 = scalar_lea.vmem %s10, %s725
        %p727 = scmp.lt.s32.totalorder %s34, 1
        %s728 = scalar_select %p727, %s34, 1
        %s729 = scalar_lea.vmem %s11, %s728
        %p730 = scmp.lt.s32.totalorder %s34, 1
        %s731 = scalar_select %p730, %s34, 1
        %s732 = scalar_lea.vmem %s12, %s731
        %p733 = scmp.lt.s32.totalorder %s34, 1
        %s734 = scalar_select %p733, %s34, 1
        %s735 = smul.addr %s734, 4
        %s736 = smul.addr %s735, 4
        %s737 = scalar_lea.vmem %s13, %s736
        %p738 = scmp.lt.s32.totalorder %s34, 1
        %s739 = scalar_select %p738, %s34, 1
        %s740 = scalar_lea.vmem %s14, %s739
        %p741 = scmp.lt.s32.totalorder %s34, 1
        %s742 = scalar_select %p741, %s34, 1
        %s743 = smul.addr %s742, 16
        %s744 = smul.addr %s743, 4
        %s745 = scalar_lea.vmem %s15, %s744
        %p746 = scmp.lt.s32.totalorder %s34, 1
        %s747 = scalar_select %p746, %s34, 1
        %s748 = scalar_lea.vmem %s16, %s747
        %s749 = smul.u32 2, %s33
        %p751 = scmp.eq.s32.totalorder %s34, 0
        // Predicated region
        $region89: #{tpu_custom_call.1} parent=87 // pred_check
          %p752 = pneg %p751
        $region90: #{tpu_custom_call.1} parent=87 // pred_check_branch
          %754 = sbr.rel (%p752) target = $region92
        $region91: #{tpu_custom_call.1} parent=87 // pred_region
          %v755 = vld [vmem:[%s703] sm:$0xff]
          %v756 = vld [vmem:[%s703 + $0x8] sm:$0xff]
          %v757 = vld [vmem:[%s703 + $0x10] sm:$0x3]
          %v758 = vld [vmem:[%s703 + $0x18] sm:$0x3]
          %v759 = vpack.c.bf16 %v757, %v755
          %v760 = vpack.c.bf16 %v758, %v756
          %v761 = vld [vmem:[%s1] sm:$0xf]
          %v762 = vld [vmem:[%s1 + $0x4] sm:$0xf]
          %v763 = vld [vmem:[%s1 + $0x8] sm:$0xf]
          %v764 = vld [vmem:[%s1 + $0xc] sm:$0xf]
          %v765 = vld [vmem:[%s1 + $0x10] sm:$0xf]
          %v766 = vld [vmem:[%s1 + $0x14] sm:$0xf]
          %v767 = vld [vmem:[%s1 + $0x18] sm:$0xf]
          %v768 = vld [vmem:[%s1 + $0x1c] sm:$0xf]
          %v769 = vld [vmem:[%s1 + $0x20] sm:$0xf]
          %v770 = vld [vmem:[%s1 + $0x24] sm:$0xf]
          %v771 = vld [vmem:[%s1 + $0x28] sm:$0xf]
          %v772 = vld [vmem:[%s1 + $0x2c] sm:$0xf]
          %v773 = vld [vmem:[%s1 + $0x30] sm:$0xf]
          %v774 = vld [vmem:[%s1 + $0x34] sm:$0xf]
          %v775 = vld [vmem:[%s1 + $0x38] sm:$0xf]
          %v776 = vld [vmem:[%s1 + $0x3c] sm:$0xf]
          %v777 = vld [vmem:[%s1 + $0x40] sm:$0xf]
          %v778 = vld [vmem:[%s1 + $0x44] sm:$0xf]
          %v779 = vld [vmem:[%s1 + $0x48] sm:$0xf]
          %v780 = vld [vmem:[%s1 + $0x4c] sm:$0xf]
          %v781 = vld [vmem:[%s1 + $0x50] sm:$0xf]
          %v782 = vld [vmem:[%s1 + $0x54] sm:$0xf]
          %v783 = vld [vmem:[%s1 + $0x58] sm:$0xf]
          %v784 = vld [vmem:[%s1 + $0x5c] sm:$0xf]
          %v785 = vld [vmem:[%s2] sm:$0xff]
          %v786 = vld [vmem:[%s2 + $0x8] sm:$0x3]
          %v811 = vunpack.c.l.b16 %v761
          %v812 = vunpack.c.l.b16 %v762
          %v813 = vunpack.c.l.b16 %v763
          %v814 = vunpack.c.l.b16 %v764
          %v815 = vunpack.c.l.b16 %v765
          %v816 = vunpack.c.l.b16 %v766
          %v817 = vunpack.c.l.b16 %v767
          %v818 = vunpack.c.l.b16 %v768
          %v819 = vunpack.c.l.b16 %v769
          %v820 = vunpack.c.l.b16 %v770
          %v821 = vunpack.c.l.b16 %v771
          %v822 = vunpack.c.l.b16 %v772
          %v823 = vunpack.c.l.b16 %v773
          %v824 = vunpack.c.l.b16 %v774
          %v825 = vunpack.c.l.b16 %v775
          %v826 = vunpack.c.l.b16 %v776
          %v827 = vunpack.c.l.b16 %v777
          %v828 = vunpack.c.l.b16 %v778
          %v829 = vunpack.c.l.b16 %v779
          %v830 = vunpack.c.l.b16 %v780
          %v831 = vunpack.c.l.b16 %v781
          %v832 = vunpack.c.l.b16 %v782
          %v833 = vunpack.c.l.b16 %v783
          %v834 = vunpack.c.l.b16 %v784
          %v835 = vpack.c.b16 %v812, %v811
          %v836 = vpack.c.b16 %v814, %v813
          %v837 = vpack.c.b16 %v816, %v815
          %v838 = vpack.c.b16 %v818, %v817
          %v839 = vpack.c.b16 %v820, %v819
          %v840 = vpack.c.b16 %v822, %v821
          %v841 = vpack.c.b16 %v824, %v823
          %v842 = vpack.c.b16 %v826, %v825
          %v843 = vpack.c.b16 %v828, %v827
          %v844 = vpack.c.b16 %v830, %v829
          %v845 = vpack.c.b16 %v832, %v831
          %v846 = vpack.c.b16 %v834, %v833
          %vm859 = vcmask 523264
          %v861 = vsel %vm859, %v760, 0
          %863 = vmatpush.bf16.msra.mxu0 %v842
          %864 = vmatpush.bf16.msra.mxu0 %v841
          %865 = vmatpush.bf16.msra.mxu0 %v840
          %866 = vmatpush.bf16.msra.mxu0 %v839
          %867 = vmatpush.bf16.msra.mxu0 %v838
          %868 = vmatpush.bf16.msra.mxu0 %v837
          %869 = vmatpush.bf16.msra.mxu0 %v836
          %870 = vmatpush.bf16.msra.mxu0 %v835
          %871 = vmatmul.bf16.gmra.mxu0 %v759
          %v872 = vpop.f32.mrf.mxu0
          %v873 = vadd.f32 %v785, %v872
          %v874 = vpop.f32.mrf.mxu0
          %v875 = vadd.f32 %v786, %v874
          %876 = vdwg.mxu0
          %877 = vmatpush.bf16.msra.mxu0 0
          %878 = vmatpush.bf16.msra.mxu0 0
          %879 = vmatpush.bf16.msra.mxu0 0
          %880 = vmatpush.bf16.msra.mxu0 0
          %881 = vmatpush.bf16.msra.mxu0 %v846
          %882 = vmatpush.bf16.msra.mxu0 %v845
          %883 = vmatpush.bf16.msra.mxu0 %v844
          %884 = vmatpush.bf16.msra.mxu0 %v843
          %885 = vmatmul.bf16.gmra.mxu0 %v861
          %v886 = vpop.f32.mrf.mxu0
          %v887 = vadd.f32 %v873, %v886
          %v888 = vpop.f32.mrf.mxu0
          %v889 = vadd.f32 %v875, %v888
          %890 = vdwg.mxu0
          %v891 = vld [vmem:[%s3] sm:$0x1]
          %v892 = vld [vmem:[%s4] sm:$0x1]
          %vm893 = vcmask 261120
          %v894 = vsel %vm893, %v887, 0.0
          %895 = vadd.xlane.f32.xlu0 %v894
          %v896 = vpop.xlane.xlu0 %895
          %vm897 = vcmask 254976
          %v898 = vsel %vm897, %v889, 0.0
          %899 = vadd.xlane.f32.xlu0 %v898
          %v900 = vpop.xlane.xlu0 %899
          %v901 = vrcp.pop 32.0
          %v902 = vmul.f32 32.0, %v901
          %v903 = vsub.f32 1.0, %v902
          %v904 = vmul.f32 %v901, %v903
          %v905 = vadd.f32 %v901, %v904
          %vm906 = vweird.f32 %v901
          %v907 = vsel %vm906, %v901, %v905
          %v908 = vmul.f32 %v896, %v907
          %v909 = vmul.f32 %v900, %v907
          %v910 = vsub.f32 %v887, %v908
          %v911 = vsub.f32 %v889, %v909
          %v912 = vmul.f32 %v910, %v910
          %v913 = vmul.f32 %v911, %v911
          %v914 = vsel %vm893, %v912, 0.0
          %915 = vadd.xlane.f32.xlu0 %v914
          %v916 = vpop.xlane.xlu0 %915
          %v917 = vsel %vm897, %v913, 0.0
          %918 = vadd.xlane.f32.xlu0 %v917
          %v919 = vpop.xlane.xlu0 %918
          %v920 = vmul.f32 %v916, %v907
          %v921 = vmul.f32 %v919, %v907
          %v922 = vadd.f32 %v920, 1e-05
          %v923 = vadd.f32 %v921, 1e-05
          %v924 = vrsqrt.pop %v922
          %v925 = vmul.f32 %v924, %v922
          %v926 = vmul.f32 %v925, %v924
          %v927 = vmul.f32 0.5, %v926
          %v928 = vsub.f32 1.5, %v927
          %v929 = vmul.f32 %v924, %v928
          %vm930 = vweird.f32 %v922
          %vm931 = vweird.f32 %v924
          %vm932 = vmor %vm930, %vm931
          %v933 = vsel %vm932, %v924, %v929
          %v934 = vrsqrt.pop %v923
          %v935 = vmul.f32 %v934, %v923
          %v936 = vmul.f32 %v935, %v934
          %v937 = vmul.f32 0.5, %v936
          %v938 = vsub.f32 1.5, %v937
          %v939 = vmul.f32 %v934, %v938
          %vm940 = vweird.f32 %v923
          %vm941 = vweird.f32 %v934
          %vm942 = vmor %vm940, %vm941
          %v943 = vsel %vm942, %v934, %v939
          %v944 = vmul.f32 %v910, %v933
          %v945 = vmul.f32 %v911, %v943
          %v947 = vperm.slane %v891, 0
          %v949 = vmul.f32 %v944, %v947
          %v950 = vmul.f32 %v945, %v947
          %v952 = vperm.slane %v892, 0
          %v954 = vadd.f32 %v949, %v952
          %v955 = vadd.f32 %v950, %v952
          %956 = vst.msk [vmem:[#allocation2] sm:$0xff] %vm893, %v954
          %957 = vst.msk [vmem:[#allocation2 + $0x8] sm:$0x3] %vm897, %v955
        $region92: #{tpu_custom_call.1} parent=87 // pred_fallthru
          _
        %v958 = vld [vmem:[#allocation2] sm:$0xff]
        %v959 = vld [vmem:[#allocation2 + $0x8] sm:$0x3]
        %v960 = vld [vmem:[%s707] sm:$0x1]
        %v961 = vld [vmem:[%s710] sm:$0x1]
        %vm962 = vcmask 261120
        %v963 = vsel %vm962, %v958, 0.0
        %964 = vadd.xlane.f32.xlu0 %v963
        %v965 = vpop.xlane.xlu0 %964
        %vm966 = vcmask 254976
        %v967 = vsel %vm966, %v959, 0.0
        %968 = vadd.xlane.f32.xlu0 %v967
        %v969 = vpop.xlane.xlu0 %968
        %v970 = vrcp.pop 32.0
        %v971 = vmul.f32 32.0, %v970
        %v972 = vsub.f32 1.0, %v971
        %v973 = vmul.f32 %v970, %v972
        %v974 = vadd.f32 %v970, %v973
        %vm975 = vweird.f32 %v970
        %v976 = vsel %vm975, %v970, %v974
        %v977 = vmul.f32 %v965, %v976
        %v978 = vmul.f32 %v969, %v976
        %v979 = vsub.f32 %v958, %v977
        %v980 = vsub.f32 %v959, %v978
        %v981 = vmul.f32 %v979, %v979
        %v982 = vmul.f32 %v980, %v980
        %v983 = vsel %vm962, %v981, 0.0
        %984 = vadd.xlane.f32.xlu0 %v983
        %v985 = vpop.xlane.xlu0 %984
        %v986 = vsel %vm966, %v982, 0.0
        %987 = vadd.xlane.f32.xlu0 %v986
        %v988 = vpop.xlane.xlu0 %987
        %v989 = vmul.f32 %v985, %v976
        %v990 = vmul.f32 %v988, %v976
        %v991 = vadd.f32 %v989, 1e-05
        %v992 = vadd.f32 %v990, 1e-05
        %v993 = vrsqrt.pop %v991
        %v994 = vmul.f32 %v993, %v991
        %v995 = vmul.f32 %v994, %v993
        %v996 = vmul.f32 0.5, %v995
        %v997 = vsub.f32 1.5, %v996
        %v998 = vmul.f32 %v993, %v997
        %vm999 = vweird.f32 %v991
        %vm1000 = vweird.f32 %v993
        %vm1001 = vmor %vm999, %vm1000
        %v1002 = vsel %vm1001, %v993, %v998
        %v1003 = vrsqrt.pop %v992
        %v1004 = vmul.f32 %v1003, %v992
        %v1005 = vmul.f32 %v1004, %v1003
        %v1006 = vmul.f32 0.5, %v1005
        %v1007 = vsub.f32 1.5, %v1006
        %v1008 = vmul.f32 %v1003, %v1007
        %vm1009 = vweird.f32 %v992
        %vm1010 = vweird.f32 %v1003
        %vm1011 = vmor %vm1009, %vm1010
        %v1012 = vsel %vm1011, %v1003, %v1008
        %v1013 = vmul.f32 %v979, %v1002
        %v1014 = vmul.f32 %v980, %v1012
        %v1016 = vperm.slane %v960, 0
        %v1018 = vmul.f32 %v1013, %v1016
        %v1019 = vmul.f32 %v1014, %v1016
        %v1021 = vperm.slane %v961, 0
        %v1023 = vadd.f32 %v1018, %v1021
        %v1024 = vadd.f32 %v1019, %v1021
        %v1025 = vpack.c.bf16 %v1024, %v1023
        %v1026 = vld [vmem:[%s715] sm:$0xf]
        %v1027 = vld [vmem:[%s715 + $0x4] sm:$0xf]
        %v1028 = vld [vmem:[%s715 + $0x8] sm:$0xf]
        %v1029 = vld [vmem:[%s715 + $0xc] sm:$0xf]
        %v1030 = vld [vmem:[%s718] sm:$0x1]
        %v1032 = vperm.slane %v1030, 0
        %v1038 = vunpack.c.l.b16 %v1026
        %v1039 = vunpack.c.l.b16 %v1027
        %v1040 = vunpack.c.l.b16 %v1028
        %v1041 = vunpack.c.l.b16 %v1029
        %v1042 = vpack.c.b16 %v1039, %v1038
        %v1043 = vpack.c.b16 %v1041, %v1040
        %v1047 = vsel %vm962, %v1025, 0
        %1049 = vmatpush.bf16.msra.mxu0 0
        %1050 = vmatpush.bf16.msra.mxu0 0
        %1051 = vmatpush.bf16.msra.mxu0 0
        %1052 = vmatpush.bf16.msra.mxu0 0
        %1053 = vmatpush.bf16.msra.mxu0 0
        %1054 = vmatpush.bf16.msra.mxu0 0
        %1055 = vmatpush.bf16.msra.mxu0 %v1043
        %1056 = vmatpush.bf16.msra.mxu0 %v1042
        %1057 = vmatmul.bf16.gmra.mxu0 %v1047
        %v1058 = vpop.f32.mrf.mxu0
        %v1059 = vadd.f32 %v1032, %v1058
        %v1060 = vpop.f32.mrf.mxu0
        %v1061 = vadd.f32 %v1032, %v1060
        %1062 = vdwg.mxu0
        %1064 = vrot.lane.b32.xlu0 %v1059, 120
        %v1065 = vpop.permute.xlu0 %1064
        %1067 = vrot.lane.b32.xlu0 %v1059, 112
        %v1068 = vpop.permute.xlu0 %1067
        %1070 = vrot.lane.b32.xlu0 %v1059, 104
        %v1071 = vpop.permute.xlu0 %1070
        %vm1074 = vcmask 1042432
        %v1075 = vrot.slane %v1059, 5
        %v1076 = vrot.slane %v1061, 5
        %v1077 = vsel %vm1074, %v1075, %v1076
        %1079 = vrot.lane.b32.xlu0 %v1077, 120
        %v1080 = vpop.permute.xlu0 %1079
        %1082 = vrot.lane.b32.xlu0 %v1077, 112
        %v1083 = vpop.permute.xlu0 %1082
        %1085 = vrot.lane.b32.xlu0 %v1077, 104
        %v1086 = vpop.permute.xlu0 %1085
        %v1088 = vpack.c.bf16 %v1059, %v1059
        %v1089 = vpack.c.bf16 %v1065, %v1065
        %v1090 = vpack.c.bf16 %v1068, %v1068
        %v1091 = vpack.c.bf16 %v1071, %v1071
        %v1092 = vpack.c.bf16 %v1077, %v1077
        %v1093 = vpack.c.bf16 %v1080, %v1080
        %v1094 = vpack.c.bf16 %v1083, %v1083
        %v1095 = vpack.c.bf16 %v1086, %v1086
        %v1097 = vunpack.c.l.b16 %v1088
        %v1098 = vpack.c.b16 %v1097, %v1097
        %1099 = vrot.lane.b32.xlu0 %v1098, 96
        %v1100 = vpop.permute.xlu0 %1099
        %vm1101 = vcmask 64512
        %v1103 = vsel %vm1101, %v1088, 0
        %v1106 = vsel %vm1101, %v1100, 0
        %1108 = vmatpush.bf16.xpose.msra.mxu0 0
        %1109 = vmatpush.bf16.xpose.msra.mxu0 0
        %1110 = vmatpush.bf16.xpose.msra.mxu0 0
        %1111 = vmatpush.bf16.xpose.msra.mxu0 0
        %1112 = vmatpush.bf16.xpose.msra.mxu0 0
        %1113 = vmatpush.bf16.xpose.msra.mxu0 0
        %1114 = vmatpush.bf16.xpose.msra.mxu0 0
        %1115 = vmatpush.bf16.xpose.msra.mxu0 %v1106
        %1116 = vmatmul.bf16.gmra.mxu0 %v1103
        %v1117 = vpop.f32.mrf.mxu0
        %v1118 = vadd.f32 0.0, %v1117
        %v1119 = vpop.f32.mrf.mxu0
        %1120 = vdwg.mxu0
        %v1122 = vunpack.c.l.b16 %v1089
        %v1123 = vpack.c.b16 %v1122, %v1122
        %1124 = vrot.lane.b32.xlu0 %v1123, 96
        %v1125 = vpop.permute.xlu0 %1124
        %v1127 = vsel %vm1101, %v1089, 0
        %v1130 = vsel %vm1101, %v1125, 0
        %1132 = vmatpush.bf16.xpose.msra.mxu0 0
        %1133 = vmatpush.bf16.xpose.msra.mxu0 0
        %1134 = vmatpush.bf16.xpose.msra.mxu0 0
        %1135 = vmatpush.bf16.xpose.msra.mxu0 0
        %1136 = vmatpush.bf16.xpose.msra.mxu0 0
        %1137 = vmatpush.bf16.xpose.msra.mxu0 0
        %1138 = vmatpush.bf16.xpose.msra.mxu0 0
        %1139 = vmatpush.bf16.xpose.msra.mxu0 %v1130
        %1140 = vmatmul.bf16.gmra.mxu0 %v1127
        %v1141 = vpop.f32.mrf.mxu0
        %v1142 = vadd.f32 0.0, %v1141
        %v1143 = vpop.f32.mrf.mxu0
        %1144 = vdwg.mxu0
        %v1146 = vunpack.c.l.b16 %v1090
        %v1147 = vpack.c.b16 %v1146, %v1146
        %1148 = vrot.lane.b32.xlu0 %v1147, 96
        %v1149 = vpop.permute.xlu0 %1148
        %v1151 = vsel %vm1101, %v1090, 0
        %v1154 = vsel %vm1101, %v1149, 0
        %1156 = vmatpush.bf16.xpose.msra.mxu0 0
        %1157 = vmatpush.bf16.xpose.msra.mxu0 0
        %1158 = vmatpush.bf16.xpose.msra.mxu0 0
        %1159 = vmatpush.bf16.xpose.msra.mxu0 0
        %1160 = vmatpush.bf16.xpose.msra.mxu0 0
        %1161 = vmatpush.bf16.xpose.msra.mxu0 0
        %1162 = vmatpush.bf16.xpose.msra.mxu0 0
        %1163 = vmatpush.bf16.xpose.msra.mxu0 %v1154
        %1164 = vmatmul.bf16.gmra.mxu0 %v1151
        %v1165 = vpop.f32.mrf.mxu0
        %v1166 = vadd.f32 0.0, %v1165
        %v1167 = vpop.f32.mrf.mxu0
        %1168 = vdwg.mxu0
        %v1170 = vunpack.c.l.b16 %v1091
        %v1171 = vpack.c.b16 %v1170, %v1170
        %1172 = vrot.lane.b32.xlu0 %v1171, 96
        %v1173 = vpop.permute.xlu0 %1172
        %v1175 = vsel %vm1101, %v1091, 0
        %v1178 = vsel %vm1101, %v1173, 0
        %1180 = vmatpush.bf16.xpose.msra.mxu0 0
        %1181 = vmatpush.bf16.xpose.msra.mxu0 0
        %1182 = vmatpush.bf16.xpose.msra.mxu0 0
        %1183 = vmatpush.bf16.xpose.msra.mxu0 0
        %1184 = vmatpush.bf16.xpose.msra.mxu0 0
        %1185 = vmatpush.bf16.xpose.msra.mxu0 0
        %1186 = vmatpush.bf16.xpose.msra.mxu0 0
        %1187 = vmatpush.bf16.xpose.msra.mxu0 %v1178
        %1188 = vmatmul.bf16.gmra.mxu0 %v1175
        %v1189 = vpop.f32.mrf.mxu0
        %v1190 = vadd.f32 0.0, %v1189
        %v1191 = vpop.f32.mrf.mxu0
        %1192 = vdwg.mxu0
        %v1194 = vunpack.c.l.b16 %v1092
        %v1195 = vpack.c.b16 %v1194, %v1194
        %1196 = vrot.lane.b32.xlu0 %v1195, 96
        %v1197 = vpop.permute.xlu0 %1196
        %v1199 = vsel %vm1101, %v1092, 0
        %v1202 = vsel %vm1101, %v1197, 0
        %1204 = vmatpush.bf16.xpose.msra.mxu0 0
        %1205 = vmatpush.bf16.xpose.msra.mxu0 0
        %1206 = vmatpush.bf16.xpose.msra.mxu0 0
        %1207 = vmatpush.bf16.xpose.msra.mxu0 0
        %1208 = vmatpush.bf16.xpose.msra.mxu0 0
        %1209 = vmatpush.bf16.xpose.msra.mxu0 0
        %1210 = vmatpush.bf16.xpose.msra.mxu0 0
        %1211 = vmatpush.bf16.xpose.msra.mxu0 %v1202
        %1212 = vmatmul.bf16.gmra.mxu0 %v1199
        %v1213 = vpop.f32.mrf.mxu0
        %v1214 = vadd.f32 0.0, %v1213
        %v1215 = vpop.f32.mrf.mxu0
        %1216 = vdwg.mxu0
        %v1218 = vunpack.c.l.b16 %v1093
        %v1219 = vpack.c.b16 %v1218, %v1218
        %1220 = vrot.lane.b32.xlu0 %v1219, 96
        %v1221 = vpop.permute.xlu0 %1220
        %v1223 = vsel %vm1101, %v1093, 0
        %v1226 = vsel %vm1101, %v1221, 0
        %1228 = vmatpush.bf16.xpose.msra.mxu0 0
        %1229 = vmatpush.bf16.xpose.msra.mxu0 0
        %1230 = vmatpush.bf16.xpose.msra.mxu0 0
        %1231 = vmatpush.bf16.xpose.msra.mxu0 0
        %1232 = vmatpush.bf16.xpose.msra.mxu0 0
        %1233 = vmatpush.bf16.xpose.msra.mxu0 0
        %1234 = vmatpush.bf16.xpose.msra.mxu0 0
        %1235 = vmatpush.bf16.xpose.msra.mxu0 %v1226
        %1236 = vmatmul.bf16.gmra.mxu0 %v1223
        %v1237 = vpop.f32.mrf.mxu0
        %v1238 = vadd.f32 0.0, %v1237
        %v1239 = vpop.f32.mrf.mxu0
        %1240 = vdwg.mxu0
        %v1242 = vunpack.c.l.b16 %v1094
        %v1243 = vpack.c.b16 %v1242, %v1242
        %1244 = vrot.lane.b32.xlu0 %v1243, 96
        %v1245 = vpop.permute.xlu0 %1244
        %v1247 = vsel %vm1101, %v1094, 0
        %v1250 = vsel %vm1101, %v1245, 0
        %1252 = vmatpush.bf16.xpose.msra.mxu0 0
        %1253 = vmatpush.bf16.xpose.msra.mxu0 0
        %1254 = vmatpush.bf16.xpose.msra.mxu0 0
        %1255 = vmatpush.bf16.xpose.msra.mxu0 0
        %1256 = vmatpush.bf16.xpose.msra.mxu0 0
        %1257 = vmatpush.bf16.xpose.msra.mxu0 0
        %1258 = vmatpush.bf16.xpose.msra.mxu0 0
        %1259 = vmatpush.bf16.xpose.msra.mxu0 %v1250
        %1260 = vmatmul.bf16.gmra.mxu0 %v1247
        %v1261 = vpop.f32.mrf.mxu0
        %v1262 = vadd.f32 0.0, %v1261
        %v1263 = vpop.f32.mrf.mxu0
        %1264 = vdwg.mxu0
        %v1266 = vunpack.c.l.b16 %v1095
        %v1267 = vpack.c.b16 %v1266, %v1266
        %1268 = vrot.lane.b32.xlu0 %v1267, 96
        %v1269 = vpop.permute.xlu0 %1268
        %v1271 = vsel %vm1101, %v1095, 0
        %v1274 = vsel %vm1101, %v1269, 0
        %1276 = vmatpush.bf16.xpose.msra.mxu0 0
        %1277 = vmatpush.bf16.xpose.msra.mxu0 0
        %1278 = vmatpush.bf16.xpose.msra.mxu0 0
        %1279 = vmatpush.bf16.xpose.msra.mxu0 0
        %1280 = vmatpush.bf16.xpose.msra.mxu0 0
        %1281 = vmatpush.bf16.xpose.msra.mxu0 0
        %1282 = vmatpush.bf16.xpose.msra.mxu0 0
        %1283 = vmatpush.bf16.xpose.msra.mxu0 %v1274
        %1284 = vmatmul.bf16.gmra.mxu0 %v1271
        %v1285 = vpop.f32.mrf.mxu0
        %v1286 = vadd.f32 0.0, %v1285
        %v1287 = vpop.f32.mrf.mxu0
        %1288 = vdwg.mxu0
        %v1289 = vmul.f32 %v1118, 0.35355338
        %v1290 = vmul.f32 %v1142, 0.35355338
        %v1291 = vmul.f32 %v1166, 0.35355338
        %v1292 = vmul.f32 %v1190, 0.35355338
        %v1293 = vmul.f32 %v1214, 0.35355338
        %v1294 = vmul.f32 %v1238, 0.35355338
        %v1295 = vmul.f32 %v1262, 0.35355338
        %v1296 = vmul.f32 %v1286, 0.35355338
        %vm1297 = vcmask 36864
        %v1298 = vsel %vm1297, %v1289, -inf
        %1299 = vmax.xlane.f32.xlu0 %v1298
        %v1300 = vpop.xlane.xlu0 %1299
        %v1301 = vsel %vm1297, %v1290, -inf
        %1302 = vmax.xlane.f32.xlu0 %v1301
        %v1303 = vpop.xlane.xlu0 %1302
        %v1304 = vsel %vm1297, %v1291, -inf
        %1305 = vmax.xlane.f32.xlu0 %v1304
        %v1306 = vpop.xlane.xlu0 %1305
        %v1307 = vsel %vm1297, %v1292, -inf
        %1308 = vmax.xlane.f32.xlu0 %v1307
        %v1309 = vpop.xlane.xlu0 %1308
        %v1310 = vsel %vm1297, %v1293, -inf
        %1311 = vmax.xlane.f32.xlu0 %v1310
        %v1312 = vpop.xlane.xlu0 %1311
        %v1313 = vsel %vm1297, %v1294, -inf
        %1314 = vmax.xlane.f32.xlu0 %v1313
        %v1315 = vpop.xlane.xlu0 %1314
        %v1316 = vsel %vm1297, %v1295, -inf
        %1317 = vmax.xlane.f32.xlu0 %v1316
        %v1318 = vpop.xlane.xlu0 %1317
        %v1319 = vsel %vm1297, %v1296, -inf
        %1320 = vmax.xlane.f32.xlu0 %v1319
        %v1321 = vpop.xlane.xlu0 %1320
        %v1322 = vsub.f32 %v1289, %v1300
        %v1323 = vsub.f32 %v1290, %v1303
        %v1324 = vsub.f32 %v1291, %v1306
        %v1325 = vsub.f32 %v1292, %v1309
        %v1326 = vsub.f32 %v1293, %v1312
        %v1327 = vsub.f32 %v1294, %v1315
        %v1328 = vsub.f32 %v1295, %v1318
        %v1329 = vsub.f32 %v1296, %v1321
        %v1330 = vmul.f32 %v1322, 1.442695
        %v1331 = vpow.pop %v1330
        %v1332 = vmul.f32 %v1323, 1.442695
        %v1333 = vpow.pop %v1332
        %v1334 = vmul.f32 %v1324, 1.442695
        %v1335 = vpow.pop %v1334
        %v1336 = vmul.f32 %v1325, 1.442695
        %v1337 = vpow.pop %v1336
        %v1338 = vmul.f32 %v1326, 1.442695
        %v1339 = vpow.pop %v1338
        %v1340 = vmul.f32 %v1327, 1.442695
        %v1341 = vpow.pop %v1340
        %v1342 = vmul.f32 %v1328, 1.442695
        %v1343 = vpow.pop %v1342
        %v1344 = vmul.f32 %v1329, 1.442695
        %v1345 = vpow.pop %v1344
        %v1346 = vsel %vm1297, %v1331, 0.0
        %1347 = vadd.xlane.f32.xlu0 %v1346
        %v1348 = vpop.xlane.xlu0 %1347
        %v1349 = vsel %vm1297, %v1333, 0.0
        %1350 = vadd.xlane.f32.xlu0 %v1349
        %v1351 = vpop.xlane.xlu0 %1350
        %v1352 = vsel %vm1297, %v1335, 0.0
        %1353 = vadd.xlane.f32.xlu0 %v1352
        %v1354 = vpop.xlane.xlu0 %1353
        %v1355 = vsel %vm1297, %v1337, 0.0
        %1356 = vadd.xlane.f32.xlu0 %v1355
        %v1357 = vpop.xlane.xlu0 %1356
        %v1358 = vsel %vm1297, %v1339, 0.0
        %1359 = vadd.xlane.f32.xlu0 %v1358
        %v1360 = vpop.xlane.xlu0 %1359
        %v1361 = vsel %vm1297, %v1341, 0.0
        %1362 = vadd.xlane.f32.xlu0 %v1361
        %v1363 = vpop.xlane.xlu0 %1362
        %v1364 = vsel %vm1297, %v1343, 0.0
        %1365 = vadd.xlane.f32.xlu0 %v1364
        %v1366 = vpop.xlane.xlu0 %1365
        %v1367 = vsel %vm1297, %v1345, 0.0
        %1368 = vadd.xlane.f32.xlu0 %v1367
        %v1369 = vpop.xlane.xlu0 %1368
        %v1370 = vrcp.pop %v1348
        %v1371 = vrcp.pop %v1351
        %v1372 = vrcp.pop %v1354
        %v1373 = vrcp.pop %v1357
        %v1374 = vrcp.pop %v1360
        %v1375 = vrcp.pop %v1363
        %v1376 = vrcp.pop %v1366
        %v1377 = vrcp.pop %v1369
        %v1378 = vmul.f32 %v1331, %v1370
        %v1379 = vmul.f32 %v1333, %v1371
        %v1380 = vmul.f32 %v1335, %v1372
        %v1381 = vmul.f32 %v1337, %v1373
        %v1382 = vmul.f32 %v1339, %v1374
        %v1383 = vmul.f32 %v1341, %v1375
        %v1384 = vmul.f32 %v1343, %v1376
        %v1385 = vmul.f32 %v1345, %v1377
        %v1386 = vpack.c.bf16 %v1378, %v1378
        %v1387 = vpack.c.bf16 %v1379, %v1379
        %v1388 = vpack.c.bf16 %v1380, %v1380
        %v1389 = vpack.c.bf16 %v1381, %v1381
        %v1390 = vpack.c.bf16 %v1382, %v1382
        %v1391 = vpack.c.bf16 %v1383, %v1383
        %v1392 = vpack.c.bf16 %v1384, %v1384
        %v1393 = vpack.c.bf16 %v1385, %v1385
        %1394 = vrot.lane.b32.xlu0 %v1098, 64
        %v1395 = vpop.permute.xlu0 %1394
        %vm1396 = vcmask 39936
        %v1398 = vsel %vm1396, %v1386, 0
        %vm1400 = vcmask 1041408
        %v1401 = vsel %vm1400, 4294967295, 65535
        %v1402 = vsel %vm1074, %v1401, 0
        %v1404 = vand.u32 %v1395, %v1402
        %1406 = vmatpush.bf16.msra.mxu0 0
        %1407 = vmatpush.bf16.msra.mxu0 0
        %1408 = vmatpush.bf16.msra.mxu0 0
        %1409 = vmatpush.bf16.msra.mxu0 0
        %1410 = vmatpush.bf16.msra.mxu0 0
        %1411 = vmatpush.bf16.msra.mxu0 0
        %1412 = vmatpush.bf16.msra.mxu0 0
        %1413 = vmatpush.bf16.msra.mxu0 %v1404
        %1414 = vmatmul.bf16.gmra.mxu0 %v1398
        %v1415 = vpop.f32.mrf.mxu0
        %v1416 = vadd.f32 0.0, %v1415
        %v1417 = vpop.f32.mrf.mxu0
        %1418 = vdwg.mxu0
        %1419 = vrot.lane.b32.xlu0 %v1123, 64
        %v1420 = vpop.permute.xlu0 %1419
        %v1422 = vsel %vm1396, %v1387, 0
        %v1425 = vand.u32 %v1420, %v1402
        %1427 = vmatpush.bf16.msra.mxu0 0
        %1428 = vmatpush.bf16.msra.mxu0 0
        %1429 = vmatpush.bf16.msra.mxu0 0
        %1430 = vmatpush.bf16.msra.mxu0 0
        %1431 = vmatpush.bf16.msra.mxu0 0
        %1432 = vmatpush.bf16.msra.mxu0 0
        %1433 = vmatpush.bf16.msra.mxu0 0
        %1434 = vmatpush.bf16.msra.mxu0 %v1425
        %1435 = vmatmul.bf16.gmra.mxu0 %v1422
        %v1436 = vpop.f32.mrf.mxu0
        %v1437 = vadd.f32 0.0, %v1436
        %v1438 = vpop.f32.mrf.mxu0
        %1439 = vdwg.mxu0
        %1440 = vrot.lane.b32.xlu0 %v1147, 64
        %v1441 = vpop.permute.xlu0 %1440
        %v1443 = vsel %vm1396, %v1388, 0
        %v1446 = vand.u32 %v1441, %v1402
        %1448 = vmatpush.bf16.msra.mxu0 0
        %1449 = vmatpush.bf16.msra.mxu0 0
        %1450 = vmatpush.bf16.msra.mxu0 0
        %1451 = vmatpush.bf16.msra.mxu0 0
        %1452 = vmatpush.bf16.msra.mxu0 0
        %1453 = vmatpush.bf16.msra.mxu0 0
        %1454 = vmatpush.bf16.msra.mxu0 0
        %1455 = vmatpush.bf16.msra.mxu0 %v1446
        %1456 = vmatmul.bf16.gmra.mxu0 %v1443
        %v1457 = vpop.f32.mrf.mxu0
        %v1458 = vadd.f32 0.0, %v1457
        %v1459 = vpop.f32.mrf.mxu0
        %1460 = vdwg.mxu0
        %1461 = vrot.lane.b32.xlu0 %v1171, 64
        %v1462 = vpop.permute.xlu0 %1461
        %v1464 = vsel %vm1396, %v1389, 0
        %v1467 = vand.u32 %v1462, %v1402
        %1469 = vmatpush.bf16.msra.mxu0 0
        %1470 = vmatpush.bf16.msra.mxu0 0
        %1471 = vmatpush.bf16.msra.mxu0 0
        %1472 = vmatpush.bf16.msra.mxu0 0
        %1473 = vmatpush.bf16.msra.mxu0 0
        %1474 = vmatpush.bf16.msra.mxu0 0
        %1475 = vmatpush.bf16.msra.mxu0 0
        %1476 = vmatpush.bf16.msra.mxu0 %v1467
        %1477 = vmatmul.bf16.gmra.mxu0 %v1464
        %v1478 = vpop.f32.mrf.mxu0
        %v1479 = vadd.f32 0.0, %v1478
        %v1480 = vpop.f32.mrf.mxu0
        %1481 = vdwg.mxu0
        %1482 = vrot.lane.b32.xlu0 %v1195, 64
        %v1483 = vpop.permute.xlu0 %1482
        %v1485 = vsel %vm1396, %v1390, 0
        %v1488 = vand.u32 %v1483, %v1402
        %1490 = vmatpush.bf16.msra.mxu0 0
        %1491 = vmatpush.bf16.msra.mxu0 0
        %1492 = vmatpush.bf16.msra.mxu0 0
        %1493 = vmatpush.bf16.msra.mxu0 0
        %1494 = vmatpush.bf16.msra.mxu0 0
        %1495 = vmatpush.bf16.msra.mxu0 0
        %1496 = vmatpush.bf16.msra.mxu0 0
        %1497 = vmatpush.bf16.msra.mxu0 %v1488
        %1498 = vmatmul.bf16.gmra.mxu0 %v1485
        %v1499 = vpop.f32.mrf.mxu0
        %v1500 = vadd.f32 0.0, %v1499
        %v1501 = vpop.f32.mrf.mxu0
        %1502 = vdwg.mxu0
        %1503 = vrot.lane.b32.xlu0 %v1219, 64
        %v1504 = vpop.permute.xlu0 %1503
        %v1506 = vsel %vm1396, %v1391, 0
        %v1509 = vand.u32 %v1504, %v1402
        %1511 = vmatpush.bf16.msra.mxu0 0
        %1512 = vmatpush.bf16.msra.mxu0 0
        %1513 = vmatpush.bf16.msra.mxu0 0
        %1514 = vmatpush.bf16.msra.mxu0 0
        %1515 = vmatpush.bf16.msra.mxu0 0
        %1516 = vmatpush.bf16.msra.mxu0 0
        %1517 = vmatpush.bf16.msra.mxu0 0
        %1518 = vmatpush.bf16.msra.mxu0 %v1509
        %1519 = vmatmul.bf16.gmra.mxu0 %v1506
        %v1520 = vpop.f32.mrf.mxu0
        %v1521 = vadd.f32 0.0, %v1520
        %v1522 = vpop.f32.mrf.mxu0
        %1523 = vdwg.mxu0
        %1524 = vrot.lane.b32.xlu0 %v1243, 64
        %v1525 = vpop.permute.xlu0 %1524
        %v1527 = vsel %vm1396, %v1392, 0
        %v1530 = vand.u32 %v1525, %v1402
        %1532 = vmatpush.bf16.msra.mxu0 0
        %1533 = vmatpush.bf16.msra.mxu0 0
        %1534 = vmatpush.bf16.msra.mxu0 0
        %1535 = vmatpush.bf16.msra.mxu0 0
        %1536 = vmatpush.bf16.msra.mxu0 0
        %1537 = vmatpush.bf16.msra.mxu0 0
        %1538 = vmatpush.bf16.msra.mxu0 0
        %1539 = vmatpush.bf16.msra.mxu0 %v1530
        %1540 = vmatmul.bf16.gmra.mxu0 %v1527
        %v1541 = vpop.f32.mrf.mxu0
        %v1542 = vadd.f32 0.0, %v1541
        %v1543 = vpop.f32.mrf.mxu0
        %1544 = vdwg.mxu0
        %1545 = vrot.lane.b32.xlu0 %v1267, 64
        %v1546 = vpop.permute.xlu0 %1545
        %v1548 = vsel %vm1396, %v1393, 0
        %v1551 = vand.u32 %v1546, %v1402
        %1553 = vmatpush.bf16.msra.mxu0 0
        %1554 = vmatpush.bf16.msra.mxu0 0
        %1555 = vmatpush.bf16.msra.mxu0 0
        %1556 = vmatpush.bf16.msra.mxu0 0
        %1557 = vmatpush.bf16.msra.mxu0 0
        %1558 = vmatpush.bf16.msra.mxu0 0
        %1559 = vmatpush.bf16.msra.mxu0 0
        %1560 = vmatpush.bf16.msra.mxu0 %v1551
        %1561 = vmatmul.bf16.gmra.mxu0 %v1548
        %v1562 = vpop.f32.mrf.mxu0
        %v1563 = vadd.f32 0.0, %v1562
        %v1564 = vpop.f32.mrf.mxu0
        %1565 = vdwg.mxu0
        %1567 = vrot.lane.b32.xlu0 %v1437, 8
        %v1568 = vpop.permute.xlu0 %1567
        %1571 = vrot.lane.b32.xlu0 %v1458, 16
        %v1572 = vpop.permute.xlu0 %1571
        %1575 = vrot.lane.b32.xlu0 %v1479, 24
        %v1576 = vpop.permute.xlu0 %1575
        %v1578 = vsel %vm1101, %v1416, %v1568
        %vm1579 = vcmask 130048
        %v1580 = vsel %vm1579, %v1578, %v1572
        %vm1581 = vcmask 195584
        %v1582 = vsel %vm1581, %v1580, %v1576
        %1584 = vrot.lane.b32.xlu0 %v1521, 8
        %v1585 = vpop.permute.xlu0 %1584
        %1588 = vrot.lane.b32.xlu0 %v1542, 16
        %v1589 = vpop.permute.xlu0 %1588
        %1592 = vrot.lane.b32.xlu0 %v1563, 24
        %v1593 = vpop.permute.xlu0 %1592
        %v1595 = vsel %vm1101, %v1500, %v1585
        %v1596 = vsel %vm1579, %v1595, %v1589
        %v1597 = vsel %vm1581, %v1596, %v1593
        %v1599 = vrot.slane %v1597, 3
        %vm1601 = vcmask 1044480
        %v1602 = vsel %vm1601, %v1582, %v1599
        %v1603 = vpack.c.bf16 %v1599, %v1602
        %v1604 = vld [vmem:[%s723] sm:$0xf]
        %v1605 = vld [vmem:[%s723 + $0x4] sm:$0xf]
        %v1606 = vld [vmem:[%s723 + $0x8] sm:$0xf]
        %v1607 = vld [vmem:[%s723 + $0xc] sm:$0xf]
        %v1608 = vld [vmem:[%s726] sm:$0x1]
        %v1610 = vperm.slane %v1608, 0
        %v1616 = vunpack.c.l.b16 %v1604
        %v1617 = vunpack.c.l.b16 %v1605
        %v1618 = vunpack.c.l.b16 %v1606
        %v1619 = vunpack.c.l.b16 %v1607
        %v1620 = vpack.c.b16 %v1617, %v1616
        %v1621 = vpack.c.b16 %v1619, %v1618
        %v1625 = vsel %vm962, %v1603, 0
        %1627 = vmatpush.bf16.msra.mxu0 0
        %1628 = vmatpush.bf16.msra.mxu0 0
        %1629 = vmatpush.bf16.msra.mxu0 0
        %1630 = vmatpush.bf16.msra.mxu0 0
        %1631 = vmatpush.bf16.msra.mxu0 0
        %1632 = vmatpush.bf16.msra.mxu0 0
        %1633 = vmatpush.bf16.msra.mxu0 %v1621
        %1634 = vmatpush.bf16.msra.mxu0 %v1620
        %1635 = vmatmul.bf16.gmra.mxu0 %v1625
        %v1636 = vpop.f32.mrf.mxu0
        %v1637 = vadd.f32 %v1610, %v1636
        %v1638 = vpop.f32.mrf.mxu0
        %v1639 = vadd.f32 %v1610, %v1638
        %1640 = vdwg.mxu0
        %v1641 = vadd.f32 %v958, %v1637
        %v1642 = vadd.f32 %v959, %v1639
        %v1643 = vld [vmem:[%s729] sm:$0x1]
        %v1644 = vld [vmem:[%s732] sm:$0x1]
        %v1645 = vsel %vm962, %v1641, 0.0
        %1646 = vadd.xlane.f32.xlu0 %v1645
        %v1647 = vpop.xlane.xlu0 %1646
        %v1648 = vsel %vm966, %v1642, 0.0
        %1649 = vadd.xlane.f32.xlu0 %v1648
        %v1650 = vpop.xlane.xlu0 %1649
        %v1651 = vmul.f32 %v1647, %v976
        %v1652 = vmul.f32 %v1650, %v976
        %v1653 = vsub.f32 %v1641, %v1651
        %v1654 = vsub.f32 %v1642, %v1652
        %v1655 = vmul.f32 %v1653, %v1653
        %v1656 = vmul.f32 %v1654, %v1654
        %v1657 = vsel %vm962, %v1655, 0.0
        %1658 = vadd.xlane.f32.xlu0 %v1657
        %v1659 = vpop.xlane.xlu0 %1658
        %v1660 = vsel %vm966, %v1656, 0.0
        %1661 = vadd.xlane.f32.xlu0 %v1660
        %v1662 = vpop.xlane.xlu0 %1661
        %v1663 = vmul.f32 %v1659, %v976
        %v1664 = vmul.f32 %v1662, %v976
        %v1665 = vadd.f32 %v1663, 1e-05
        %v1666 = vadd.f32 %v1664, 1e-05
        %v1667 = vrsqrt.pop %v1665
        %v1668 = vmul.f32 %v1667, %v1665
        %v1669 = vmul.f32 %v1668, %v1667
        %v1670 = vmul.f32 0.5, %v1669
        %v1671 = vsub.f32 1.5, %v1670
        %v1672 = vmul.f32 %v1667, %v1671
        %vm1673 = vweird.f32 %v1665
        %vm1674 = vweird.f32 %v1667
        %vm1675 = vmor %vm1673, %vm1674
        %v1676 = vsel %vm1675, %v1667, %v1672
        %v1677 = vrsqrt.pop %v1666
        %v1678 = vmul.f32 %v1677, %v1666
        %v1679 = vmul.f32 %v1678, %v1677
        %v1680 = vmul.f32 0.5, %v1679
        %v1681 = vsub.f32 1.5, %v1680
        %v1682 = vmul.f32 %v1677, %v1681
        %vm1683 = vweird.f32 %v1666
        %vm1684 = vweird.f32 %v1677
        %vm1685 = vmor %vm1683, %vm1684
        %v1686 = vsel %vm1685, %v1677, %v1682
        %v1687 = vmul.f32 %v1653, %v1676
        %v1688 = vmul.f32 %v1654, %v1686
        %v1690 = vperm.slane %v1643, 0
        %v1692 = vmul.f32 %v1687, %v1690
        %v1693 = vmul.f32 %v1688, %v1690
        %v1695 = vperm.slane %v1644, 0
        %v1697 = vadd.f32 %v1692, %v1695
        %v1698 = vadd.f32 %v1693, %v1695
        %v1699 = vpack.c.bf16 %v1698, %v1697
        %v1700 = vld [vmem:[%s737] sm:$0xf]
        %v1701 = vld [vmem:[%s737 + $0x4] sm:$0xf]
        %v1702 = vld [vmem:[%s737 + $0x8] sm:$0xf]
        %v1703 = vld [vmem:[%s737 + $0xc] sm:$0xf]
        %v1704 = vld [vmem:[%s740] sm:$0x1]
        %v1706 = vperm.slane %v1704, 0
        %v1712 = vunpack.c.l.b16 %v1700
        %v1713 = vunpack.c.l.b16 %v1701
        %v1714 = vunpack.c.l.b16 %v1702
        %v1715 = vunpack.c.l.b16 %v1703
        %v1716 = vpack.c.b16 %v1713, %v1712
        %v1717 = vpack.c.b16 %v1715, %v1714
        %v1721 = vsel %vm962, %v1699, 0
        %1723 = vmatpush.bf16.msra.mxu0 0
        %1724 = vmatpush.bf16.msra.mxu0 0
        %1725 = vmatpush.bf16.msra.mxu0 0
        %1726 = vmatpush.bf16.msra.mxu0 0
        %1727 = vmatpush.bf16.msra.mxu0 0
        %1728 = vmatpush.bf16.msra.mxu0 0
        %1729 = vmatpush.bf16.msra.mxu0 %v1717
        %1730 = vmatpush.bf16.msra.mxu0 %v1716
        %1731 = vmatmul.bf16.gmra.mxu0 %v1721
        %v1732 = vpop.f32.mrf.mxu0
        %v1733 = vadd.f32 %v1706, %v1732
        %v1734 = vpop.f32.mrf.mxu0
        %v1735 = vadd.f32 %v1706, %v1734
        %1736 = vdwg.mxu0
        %v1737 = vmul.f32 %v1733, 1.702
        %v1738 = vmul.f32 %v1735, 1.702
        %v1739 = vxor.u32 %v1737, 2147483648
        %v1740 = vxor.u32 %v1738, 2147483648
        %v1741 = vmul.f32 %v1739, 1.442695
        %v1742 = vpow.pop %v1741
        %v1743 = vmul.f32 %v1740, 1.442695
        %v1744 = vpow.pop %v1743
        %v1745 = vadd.f32 %v1742, 1.0
        %v1746 = vadd.f32 %v1744, 1.0
        %v1747 = vrcp.pop %v1745
        %v1748 = vmul.f32 %v1745, %v1747
        %v1749 = vsub.f32 1.0, %v1748
        %v1750 = vmul.f32 %v1747, %v1749
        %v1751 = vadd.f32 %v1747, %v1750
        %vm1752 = vweird.f32 %v1745
        %vm1753 = vweird.f32 %v1747
        %vm1754 = vmor %vm1752, %vm1753
        %v1755 = vsel %vm1754, %v1747, %v1751
        %v1756 = vand.u32 2147483647, %v1745
        %vm1757 = vcmp.eq.f32.partialorder %v1756, 8.507059e+37
        %v1758 = vand.u32 %v1745, 2147483648
        %v1759 = vor.u32 1.1754944e-38, %v1758
        %v1760 = vsel %vm1757, %v1759, %v1755
        %v1761 = vmul.f32 1.0, %v1760
        %v1762 = vrcp.pop %v1746
        %v1763 = vmul.f32 %v1746, %v1762
        %v1764 = vsub.f32 1.0, %v1763
        %v1765 = vmul.f32 %v1762, %v1764
        %v1766 = vadd.f32 %v1762, %v1765
        %vm1767 = vweird.f32 %v1746
        %vm1768 = vweird.f32 %v1762
        %vm1769 = vmor %vm1767, %vm1768
        %v1770 = vsel %vm1769, %v1762, %v1766
        %v1771 = vand.u32 2147483647, %v1746
        %vm1772 = vcmp.eq.f32.partialorder %v1771, 8.507059e+37
        %v1773 = vand.u32 %v1746, 2147483648
        %v1774 = vor.u32 1.1754944e-38, %v1773
        %v1775 = vsel %vm1772, %v1774, %v1770
        %v1776 = vmul.f32 1.0, %v1775
        %v1777 = vmul.f32 %v1733, %v1761
        %v1778 = vmul.f32 %v1735, %v1776
        %v1779 = vpack.c.bf16 %v1778, %v1777
        %v1780 = vld [vmem:[%s745] sm:$0xf]
        %v1781 = vld [vmem:[%s745 + $0x4] sm:$0xf]
        %v1782 = vld [vmem:[%s745 + $0x8] sm:$0xf]
        %v1783 = vld [vmem:[%s745 + $0xc] sm:$0xf]
        %v1784 = vld [vmem:[%s745 + $0x10] sm:$0xf]
        %v1785 = vld [vmem:[%s745 + $0x14] sm:$0xf]
        %v1786 = vld [vmem:[%s745 + $0x18] sm:$0xf]
        %v1787 = vld [vmem:[%s745 + $0x1c] sm:$0xf]
        %v1788 = vld [vmem:[%s745 + $0x20] sm:$0xf]
        %v1789 = vld [vmem:[%s745 + $0x24] sm:$0xf]
        %v1790 = vld [vmem:[%s745 + $0x28] sm:$0xf]
        %v1791 = vld [vmem:[%s745 + $0x2c] sm:$0xf]
        %v1792 = vld [vmem:[%s745 + $0x30] sm:$0xf]
        %v1793 = vld [vmem:[%s745 + $0x34] sm:$0xf]
        %v1794 = vld [vmem:[%s745 + $0x38] sm:$0xf]
        %v1795 = vld [vmem:[%s745 + $0x3c] sm:$0xf]
        %v1796 = vld [vmem:[%s748] sm:$0x1]
        %v1798 = vperm.slane %v1796, 0
        %v1816 = vunpack.c.l.b16 %v1780
        %v1817 = vunpack.c.l.b16 %v1781
        %v1818 = vunpack.c.l.b16 %v1782
        %v1819 = vunpack.c.l.b16 %v1783
        %v1820 = vunpack.c.l.b16 %v1784
        %v1821 = vunpack.c.l.b16 %v1785
        %v1822 = vunpack.c.l.b16 %v1786
        %v1823 = vunpack.c.l.b16 %v1787
        %v1824 = vunpack.c.l.b16 %v1788
        %v1825 = vunpack.c.l.b16 %v1789
        %v1826 = vunpack.c.l.b16 %v1790
        %v1827 = vunpack.c.l.b16 %v1791
        %v1828 = vunpack.c.l.b16 %v1792
        %v1829 = vunpack.c.l.b16 %v1793
        %v1830 = vunpack.c.l.b16 %v1794
        %v1831 = vunpack.c.l.b16 %v1795
        %v1832 = vpack.c.b16 %v1817, %v1816
        %v1833 = vpack.c.b16 %v1819, %v1818
        %v1834 = vpack.c.b16 %v1821, %v1820
        %v1835 = vpack.c.b16 %v1823, %v1822
        %v1836 = vpack.c.b16 %v1825, %v1824
        %v1837 = vpack.c.b16 %v1827, %v1826
        %v1838 = vpack.c.b16 %v1829, %v1828
        %v1839 = vpack.c.b16 %v1831, %v1830
        %1848 = vmatpush.bf16.msra.mxu0 %v1839
        %1849 = vmatpush.bf16.msra.mxu0 %v1838
        %1850 = vmatpush.bf16.msra.mxu0 %v1837
        %1851 = vmatpush.bf16.msra.mxu0 %v1836
        %1852 = vmatpush.bf16.msra.mxu0 %v1835
        %1853 = vmatpush.bf16.msra.mxu0 %v1834
        %1854 = vmatpush.bf16.msra.mxu0 %v1833
        %1855 = vmatpush.bf16.msra.mxu0 %v1832
        %1856 = vmatmul.bf16.gmra.mxu0 %v1779
        %v1857 = vpop.f32.mrf.mxu0
        %v1858 = vadd.f32 %v1798, %v1857
        %v1859 = vpop.f32.mrf.mxu0
        %v1860 = vadd.f32 %v1798, %v1859
        %1861 = vdwg.mxu0
        %v1862 = vadd.f32 %v1641, %v1858
        %v1863 = vadd.f32 %v1642, %v1860
        %1864 = vst.msk [vmem:[#allocation2] sm:$0xff] %vm962, %v1862
        %1865 = vst.msk [vmem:[#allocation2 + $0x8] sm:$0x3] %vm966, %v1863
        %p1866 = scmp.eq.s32.totalorder %s34, 1
        // Predicated region
        $region93: #{tpu_custom_call.1} parent=87 // pred_check
          %p1867 = pneg %p1866
        $region94: #{tpu_custom_call.1} parent=87 // pred_check_branch
          %1869 = sbr.rel (%p1867) target = $region96
        $region95: #{tpu_custom_call.1} parent=87 // pred_region
          %1870 = vst.msk [vmem:[#allocation3] sm:$0xff] %vm962, %v1862
          %1871 = vst.msk [vmem:[#allocation3 + $0x8] sm:$0x3] %vm966, %v1863
        $region96: #{tpu_custom_call.1} parent=87 // pred_fallthru
          _
        // Predicated region
        $region97: #{tpu_custom_call.1} parent=87 // pred_check
          %p1872 = pneg %p481
        $region98: #{tpu_custom_call.1} parent=87 // pred_check_branch
          %1874 = sbr.rel (%p1872) target = $region100
        $region99: #{tpu_custom_call.1} parent=87 // pred_region
          %s1875 = smul.u32 2, %s33
          %1877 = vsyncadd [#allocation4], 0
          %s1878 = smul.addr %s1875, 8
          %s1879 = scalar_lea.hbm %s17, %s1878
          %s1880 = sshll.u32 [#allocation3], 4
          %s1881 = int_to_ptr.vmem [resolvable:$true] %s1880
          %s1882 = sshll.u32 %s1879, 4
          %s1883 = int_to_ptr.hbm [resolvable:$true] %s1882
          %1888 = dma.vmem_to_hbm [thread:$0]  %s1881, 256, %s1883, [#allocation4], 128, 128, 8
        $region100: #{tpu_custom_call.1} parent=87 // pred_fallthru
          _
        // Predicated region
        $region101: #{tpu_custom_call.1} parent=87 // pred_check
          %p1889 = pneg %p481
        $region102: #{tpu_custom_call.1} parent=87 // pred_check_branch
          %1891 = sbr.rel (%p1889) target = $region104
        $region103: #{tpu_custom_call.1} parent=87 // pred_region
          %1893 = dma.done [#allocation4], 256
        $region104: #{tpu_custom_call.1} parent=87 // pred_fallthru
          _
      $region88: #{tpu_custom_call.1} parent=5 // pred_fallthru
        _
      %p1894 = scmp.le.s32.totalorder 2, %s24
      // Predicated region
      $region105: #{tpu_custom_call.1} parent=5 // pred_check
        %p1895 = pneg %p1894
      $region106: #{tpu_custom_call.1} parent=5 // pred_check_branch
        %1897 = sbr.rel (%p1895) target = $region108
      $region107: #{tpu_custom_call.1} parent=5 // pred_region
        %s1898 = ssub.s32 %s24, 2
      $region108: #{tpu_custom_call.1} parent=5 // pred_fallthru
        _
    $region6: #{tpu_custom_call.1} parent=1 // loop_footer
      %s28 = sadd.s32 1, %s24
    $region7: #{tpu_custom_call.1} parent=1 // loop_footer_branch
      %23 = sbr.rel target = $region3
    $region8: #{tpu_custom_call.1} parent=1 // loop_exit
      _
    %1899 = vsyncpa [#allocation4], 1
    %s1900 = scalar_lea.sflag [#allocation4], 1
    %1901 = vsyncpa %s1900, 1

</llo_original>
